<compile_context>
chip_gen: v5e
topology: v5e:2x2
jax: 0.10.0
libtpu: 0.0.40
codegen_flags: <defaults>
</compile_context>

<pallas_src>
import functools
import math

import jax
import jax.numpy as jnp
from jax.experimental import pallas as pl
from jax.experimental.pallas import tpu as pltpu

# ----------------------------- model config (small, consistent with the module) ------
VOCAB = 64
EMBED = 32            # embed_size
NHEAD = 4
HEAD_DIM = EMBED // NHEAD
NUM_LAYERS = 2
FFN = 64              # dim_feedforward
MAX_LEN = 16
BATCH = 2
SEQ = 8
LN_EPS = 1e-5
VOCAB_PAD = 128       # lane-dense output width for the LM head

# ----------------------------- packed-slab layout (rows x 192 cols, f32) -------------
SLAB_W = 2 * EMBED + NHEAD * EMBED        # 192: [Q(32) | K(32) | V@Wo per head (4x32)]
EMB_ROW = 0                               # rows   0: 64   embedding table (64,32)
POS_ROW = VOCAB                           # rows  64: 72   pos encoding (SEQ,32)
LAYER_ROW = POS_ROW + SEQ                 # layer l base = 72 + l*LAYER_ROWS
#   per-layer layout (all row offsets relative to the layer base, 8-row aligned blocks):
#     +0  b_qkv (192,)   +1 bo_eff (32,)  +2 ln1_w  +3 ln1_b
#     +4  b_ff1 (64,)    +5 b_ff2 (32,)   +6 ln2_w  +7 ln2_b
W_QKV_OFF = 8                             # +8  : +40   fused QKV' weight (32,192)
W_FF1_OFF = W_QKV_OFF + EMBED             # +40 : +72   linear1.weight.T  (32,64)
W_FF2_OFF = W_FF1_OFF + EMBED             # +72 : +136  linear2.weight.T  (64,32)
LAYER_ROWS = W_FF2_OFF + FFN              # 136 rows per layer (multiple of 8)
HEAD_B_ROW = LAYER_ROW + NUM_LAYERS * LAYER_ROWS   # 344: head bias (1,128)
HEAD_W_ROW = HEAD_B_ROW + 8                        # 352: head weight (32,128)
SLAB_ROWS = HEAD_W_ROW + EMBED                     # 384 total rows


# ----------------------------- in-kernel helpers --------------------------------------
def _layer_norm(x, w, b):
    mu = jnp.mean(x, axis=-1, keepdims=True)
    d = x - mu
    var = jnp.mean(d * d, axis=-1, keepdims=True)
    return d * jax.lax.rsqrt(var + LN_EPS) * w + b


def _encoder_layer(x, slab_ref, base, mask, scale):
    """One nn.TransformerEncoderLayer (post-norm, relu) on flattened (B*S, E) rows."""
    # one aligned (8, 192) load covering all bias/LN rows of this layer
    bias = slab_ref[base:base + 8, :]
    b_qkv = bias[0:1, :]                       # (1, 192): [bq | bk | 0...]
    bo    = bias[1:2, :EMBED]                  # out_proj bias + folded bv@Wo
    ln1_w = bias[2:3, :EMBED]
    ln1_b = bias[3:4, :EMBED]
    b_ff1 = bias[4:5, :FFN]
    b_ff2 = bias[5:6, :EMBED]
    ln2_w = bias[6:7, :EMBED]
    ln2_b = bias[7:8, :EMBED]

    w_qkv = slab_ref[base + W_QKV_OFF:base + W_QKV_OFF + EMBED, :]       # (32, 192)
    w_ff1 = slab_ref[base + W_FF1_OFF:base + W_FF1_OFF + EMBED, :FFN]    # (32, 64)
    w_ff2 = slab_ref[base + W_FF2_OFF:base + W_FF2_OFF + FFN, :EMBED]    # (64, 32)

    # --- fused Q | K | (V@Wo) projection: ONE lane-dense MXU op per layer ---
    proj = jnp.dot(x, w_qkv, preferred_element_type=jnp.float32) + b_qkv   # (BS, 192)

    # --- multi-head self-attention with block-diagonal batch mask ---
    attn = jnp.zeros_like(x)
    for h in range(NHEAD):                                  # static unroll, NHEAD = 4
        qh = proj[:, h * HEAD_DIM:(h + 1) * HEAD_DIM]                        # (BS, 8)
        kh = proj[:, EMBED + h * HEAD_DIM:EMBED + (h + 1) * HEAD_DIM]        # (BS, 8)
        vh = proj[:, 2 * EMBED + h * EMBED:2 * EMBED + (h + 1) * EMBED]      # (BS, 32)
        s = jnp.einsum('qd,kd->qk', qh, kh,
                       preferred_element_type=jnp.float32) * scale + mask    # (BS, BS)
        s = s - jnp.max(s, axis=-1, keepdims=True)
        p = jnp.exp(s)
        p = p * pl.reciprocal(jnp.sum(p, axis=-1, keepdims=True), approx=True)
        # vh already contains the folded out-proj: chained matmul-accumulate
        attn = attn + jnp.dot(p, vh, preferred_element_type=jnp.float32)
    attn = attn + bo

    # --- residual + LayerNorm1 ---
    x1 = _layer_norm(x + attn, ln1_w, ln1_b)

    # --- feed-forward (relu) ---
    h1 = jnp.dot(x1, w_ff1, preferred_element_type=jnp.float32) + b_ff1
    h1 = jnp.maximum(h1, 0.0)
    h2 = jnp.dot(h1, w_ff2, preferred_element_type=jnp.float32) + b_ff2

    # --- residual + LayerNorm2 ---
    return _layer_norm(x1 + h2, ln2_w, ln2_b)


# ----------------------------- fused forward kernel -----------------------------------
def fused_forward_kernel(seq_len, ids_ref, slab_ref, out_ref):
    BS = ids_ref.shape[0]
    B = BS // seq_len

    # ---------- hoisted loop-invariant constants ----------
    scale = 1.0 / math.sqrt(HEAD_DIM)
    r_iota = jax.lax.broadcasted_iota(jnp.int32, (BS, BS), 0)
    c_iota = jax.lax.broadcasted_iota(jnp.int32, (BS, BS), 1)
    if seq_len & (seq_len - 1) == 0:          # power-of-two: bit-mask, no integer divide
        rb = r_iota & ~(seq_len - 1)
        cb = c_iota & ~(seq_len - 1)
    else:
        rb = (r_iota // seq_len) * seq_len
        cb = (c_iota // seq_len) * seq_len
    mask = jnp.where(rb == cb, 0.0, -1e30).astype(jnp.float32)   # block-diag batch mask

    # ---------- embedding gather as one-hot MXU matmul + positional encoding ----------
    ids = ids_ref[...]                                            # (BS, 1) int32
    onehot = (jax.lax.broadcasted_iota(jnp.int32, (BS, VOCAB), 1) == ids).astype(jnp.float32)
    emb = slab_ref[EMB_ROW:EMB_ROW + VOCAB, :EMBED]               # (64, 32)
    x = jnp.dot(onehot, emb, preferred_element_type=jnp.float32)
    pos = slab_ref[POS_ROW:POS_ROW + seq_len, :EMBED]             # (SEQ, 32)
    x = x + jnp.concatenate([pos] * B, axis=0)                    # tile over batch rows

    # ---------- both encoder layers, statically unrolled ----------
    for l in range(NUM_LAYERS):
        x = _encoder_layer(x, slab_ref, LAYER_ROW + l * LAYER_ROWS, mask, scale)

    # ---------- LM head, lane-dense padded (BS, 128) output ----------
    head_w = slab_ref[HEAD_W_ROW:HEAD_W_ROW + EMBED, :VOCAB_PAD]  # (32, 128)
    head_b = slab_ref[HEAD_B_ROW:HEAD_B_ROW + 1, :VOCAB_PAD]      # (1, 128)
    out_ref[...] = jnp.dot(x, head_w, preferred_element_type=jnp.float32) + head_b


# ----------------------------- wrapper --------------------------------------------------
def custom_transformer_forward(param_slab, input_ids, labels=None):
    """input_ids: (B, S) int32. Returns {'loss': ..., 'logits': (B, S, VOCAB)}."""
    B, S = input_ids.shape
    BS = B * S

    ids = input_ids.reshape(BS, 1).astype(jnp.int32)
    vmem_spec = pl.BlockSpec(memory_space=pltpu.MemorySpace.VMEM)

    logits_pad = pl.pallas_call(
        functools.partial(fused_forward_kernel, S),
        out_shape=jax.ShapeDtypeStruct((BS, VOCAB_PAD), jnp.float32),
        in_specs=[vmem_spec, vmem_spec],
        out_specs=vmem_spec,
    )(ids, param_slab)

    logits = logits_pad[:, :VOCAB].reshape(B, S, VOCAB)

    loss = None
    if labels is not None:
        # CrossEntropyLoss(mean) in plain JAX (glue, not a hot path at these sizes)
        logits2d = logits.reshape(-1, VOCAB)
        lbl = labels.reshape(-1)
        logz = jax.nn.logsumexp(logits2d, axis=-1)
        nll = logz - jnp.take_along_axis(logits2d, lbl[:, None], axis=-1)[:, 0]
        loss = jnp.mean(nll)
    return {"loss": loss, "logits": logits}


# ----------------------------- deterministic parameter init -----------------------------
def init_params(key):
    keys = iter(jax.random.split(key, 64))

    def normal(shape, scale=0.02):
        return (scale * jax.random.normal(next(keys), shape)).astype(jnp.float32)

    params = {
        "embedding": normal((VOCAB, EMBED)),
        "pos_encoder": jnp.zeros((1, MAX_LEN, EMBED), jnp.float32),  # torch: nn.Parameter(zeros)
        "head_w": normal((EMBED, VOCAB)),                             # head.weight.T
        "head_b": normal((VOCAB,)),
        "layers": [],
    }
    for _ in range(NUM_LAYERS):
        params["layers"].append({
            "wq": normal((EMBED, EMBED)),        # in_proj_weight[0:E].T
            "wk": normal((EMBED, EMBED)),        # in_proj_weight[E:2E].T
            "wv": normal((EMBED, EMBED)),        # in_proj_weight[2E:3E].T
            "bq": normal((EMBED,)),
            "bk": normal((EMBED,)),
            "bv": normal((EMBED,)),
            "wo": normal((EMBED, EMBED)),        # out_proj.weight.T
            "bo": normal((EMBED,)),
            "ln1_w": jnp.ones((EMBED,), jnp.float32),
            "ln1_b": jnp.zeros((EMBED,), jnp.float32),
            "w_ff1": normal((EMBED, FFN)),       # linear1.weight.T
            "b_ff1": normal((FFN,)),
            "w_ff2": normal((FFN, EMBED)),       # linear2.weight.T
            "b_ff2": normal((EMBED,)),
            "ln2_w": jnp.ones((EMBED,), jnp.float32),
            "ln2_b": jnp.zeros((EMBED,), jnp.float32),
        })
    return params


def pack_params(params):
    """Pack all parameters into one lane-dense (SLAB_ROWS, 192) f32 slab (single DMA)."""
    slab = jnp.zeros((SLAB_ROWS, SLAB_W), jnp.float32)
    slab = slab.at[EMB_ROW:EMB_ROW + VOCAB, :EMBED].set(params["embedding"])
    slab = slab.at[POS_ROW:POS_ROW + SEQ, :EMBED].set(params["pos_encoder"][0, :SEQ, :])

    for l, p in enumerate(params["layers"]):
        base = LAYER_ROW + l * LAYER_ROWS

        # fused [Q | K | V@Wo per head] projection weight, (EMBED, 192)
        w_qkv = jnp.zeros((EMBED, SLAB_W), jnp.float32)
        w_qkv = w_qkv.at[:, 0:EMBED].set(p["wq"])
        w_qkv = w_qkv.at[:, EMBED:2 * EMBED].set(p["wk"])
        for h in range(NHEAD):
            wvo_h = p["wv"][:, h * HEAD_DIM:(h + 1) * HEAD_DIM] @ \
                    p["wo"][h * HEAD_DIM:(h + 1) * HEAD_DIM, :]          # (32, 32)
            w_qkv = w_qkv.at[:, 2 * EMBED + h * EMBED:2 * EMBED + (h + 1) * EMBED].set(wvo_h)

        b_qkv = jnp.zeros((SLAB_W,), jnp.float32)
        b_qkv = b_qkv.at[0:EMBED].set(p["bq"]).at[EMBED:2 * EMBED].set(p["bk"])
        bo_eff = p["bo"] + p["bv"] @ p["wo"]      # softmax rows sum to 1 -> bv folds into bo

        slab = slab.at[base + 0, :].set(b_qkv)
        slab = slab.at[base + 1, :EMBED].set(bo_eff)
        slab = slab.at[base + 2, :EMBED].set(p["ln1_w"])
        slab = slab.at[base + 3, :EMBED].set(p["ln1_b"])
        slab = slab.at[base + 4, :FFN].set(p["b_ff1"])
        slab = slab.at[base + 5, :EMBED].set(p["b_ff2"])
        slab = slab.at[base + 6, :EMBED].set(p["ln2_w"])
        slab = slab.at[base + 7, :EMBED].set(p["ln2_b"])
        slab = slab.at[base + W_QKV_OFF:base + W_QKV_OFF + EMBED, :].set(w_qkv)
        slab = slab.at[base + W_FF1_OFF:base + W_FF1_OFF + EMBED, :FFN].set(p["w_ff1"])
        slab = slab.at[base + W_FF2_OFF:base + W_FF2_OFF + FFN, :EMBED].set(p["w_ff2"])

    slab = slab.at[HEAD_B_ROW, :VOCAB].set(params["head_b"])
    slab = slab.at[HEAD_W_ROW:HEAD_W_ROW + EMBED, :VOCAB].set(params["head_w"])
    return slab


# ----------------------------- main ------------------------------------------------------
if __name__ == "__main__":
    key = jax.random.PRNGKey(0)
    pkey, ikey, lkey = jax.random.split(key, 3)
    params = init_params(pkey)
    slab = pack_params(params)

    input_ids = jax.random.randint(ikey, (BATCH, SEQ), 0, VOCAB, dtype=jnp.int32)
    labels = jax.random.randint(lkey, (BATCH, SEQ), 0, VOCAB, dtype=jnp.int32)

    forward = jax.jit(custom_transformer_forward)
    out = forward(slab, input_ids, labels=labels)
    logits = jax.block_until_ready(out["logits"])
    loss = jax.block_until_ready(out["loss"])

    assert logits.shape == (BATCH, SEQ, VOCAB)
    assert bool(jnp.isfinite(loss))
    assert bool(jnp.all(jnp.isfinite(logits)))
    print("KERNEL_OK")
</pallas_src>

<mosaic_0001>
module attributes {stable_mosaic.version = 11 : i64} {
  func.func @fused_forward_kernel(%arg0: memref<16x1xi32, #tpu.memory_space<vmem>>, %arg1: memref<384x192xf32, #tpu.memory_space<vmem>>, %arg2: memref<16x128xf32, #tpu.memory_space<vmem>>) attributes {dimension_semantics = [], scalar_prefetch = 0 : i64, scratch_operands = 0 : i64, tpu.core_type = #tpu.core_type<tc>} {
    %0 = tpu.iota {dimensions = array<i32: 0>} : vector<16x16xi32>
    %1 = tpu.iota {dimensions = array<i32: 1>} : vector<16x16xi32>
    %c-8_i32 = arith.constant -8 : i32
    %2 = vector.broadcast %c-8_i32 : i32 to vector<16x16xi32>
    %3 = arith.andi %0, %2 : vector<16x16xi32>
    %c-8_i32_0 = arith.constant -8 : i32
    %4 = vector.broadcast %c-8_i32_0 : i32 to vector<16x16xi32>
    %5 = arith.andi %1, %4 : vector<16x16xi32>
    %6 = arith.cmpi eq, %3, %5 : vector<16x16xi32>
    %cst = arith.constant 0.000000e+00 : f32
    %cst_1 = arith.constant -1.000000e+30 : f32
    %7 = vector.broadcast %cst : f32 to vector<16x16xf32>
    %8 = vector.broadcast %cst_1 : f32 to vector<16x16xf32>
    %9 = arith.select %6, %7, %8 : vector<16x16xi1>, vector<16x16xf32>
    %c0 = arith.constant 0 : index
    %c0_2 = arith.constant 0 : index
    %10 = vector.load %arg0[%c0, %c0_2] : memref<16x1xi32, #tpu.memory_space<vmem>>, vector<16x1xi32>
    %11 = tpu.iota {dimensions = array<i32: 1>} : vector<16x64xi32>
    %12 = vector.broadcast %10 : vector<16x1xi32> to vector<16x64xi32>
    %13 = arith.cmpi eq, %11, %12 : vector<16x64xi32>
    %14 = arith.extui %13 : vector<16x64xi1> to vector<16x64xi32>
    %15 = arith.sitofp %14 : vector<16x64xi32> to vector<16x64xf32>
    %c0_3 = arith.constant 0 : index
    %c0_4 = arith.constant 0 : index
    %16 = vector.load %arg1[%c0_3, %c0_4] : memref<384x192xf32, #tpu.memory_space<vmem>>, vector<64x32xf32>
    %cst_5 = arith.constant dense<0.000000e+00> : vector<16x32xf32>
    %17 = tpu.matmul %15, %16, %cst_5 {dimension_numbers = #tpu.dot_dimension_numbers<[1], [0], [0], [1], [0, 0, 1, 1], [], []>} : vector<16x64xf32>, vector<64x32xf32>, vector<16x32xf32> -> vector<16x32xf32>
    %c64 = arith.constant 64 : index
    %c0_6 = arith.constant 0 : index
    %18 = vector.load %arg1[%c64, %c0_6] : memref<384x192xf32, #tpu.memory_space<vmem>>, vector<8x32xf32>
    %19 = tpu.concatenate %18, %18 in 0 : vector<8x32xf32>, vector<8x32xf32> -> vector<16x32xf32>
    %20 = arith.addf %17, %19 : vector<16x32xf32>
    %c72 = arith.constant 72 : index
    %c0_7 = arith.constant 0 : index
    %21 = vector.load %arg1[%c72, %c0_7] : memref<384x192xf32, #tpu.memory_space<vmem>>, vector<8x192xf32>
    %22 = vector.extract_strided_slice %21 {offsets = [0, 0], sizes = [1, 192], strides = [1, 1]} : vector<8x192xf32> to vector<1x192xf32>
    %23 = vector.extract_strided_slice %21 {offsets = [1, 0], sizes = [1, 32], strides = [1, 1]} : vector<8x192xf32> to vector<1x32xf32>
    %24 = vector.extract_strided_slice %21 {offsets = [2, 0], sizes = [1, 32], strides = [1, 1]} : vector<8x192xf32> to vector<1x32xf32>
    %25 = vector.extract_strided_slice %21 {offsets = [3, 0], sizes = [1, 32], strides = [1, 1]} : vector<8x192xf32> to vector<1x32xf32>
    %26 = vector.extract_strided_slice %21 {offsets = [4, 0], sizes = [1, 64], strides = [1, 1]} : vector<8x192xf32> to vector<1x64xf32>
    %27 = vector.extract_strided_slice %21 {offsets = [5, 0], sizes = [1, 32], strides = [1, 1]} : vector<8x192xf32> to vector<1x32xf32>
    %28 = vector.extract_strided_slice %21 {offsets = [6, 0], sizes = [1, 32], strides = [1, 1]} : vector<8x192xf32> to vector<1x32xf32>
    %29 = vector.extract_strided_slice %21 {offsets = [7, 0], sizes = [1, 32], strides = [1, 1]} : vector<8x192xf32> to vector<1x32xf32>
    %c80 = arith.constant 80 : index
    %c0_8 = arith.constant 0 : index
    %30 = vector.load %arg1[%c80, %c0_8] : memref<384x192xf32, #tpu.memory_space<vmem>>, vector<32x192xf32>
    %c112 = arith.constant 112 : index
    %c0_9 = arith.constant 0 : index
    %31 = vector.load %arg1[%c112, %c0_9] : memref<384x192xf32, #tpu.memory_space<vmem>>, vector<32x64xf32>
    %c144 = arith.constant 144 : index
    %c0_10 = arith.constant 0 : index
    %32 = vector.load %arg1[%c144, %c0_10] : memref<384x192xf32, #tpu.memory_space<vmem>>, vector<64x32xf32>
    %cst_11 = arith.constant dense<0.000000e+00> : vector<16x192xf32>
    %33 = tpu.matmul %20, %30, %cst_11 {dimension_numbers = #tpu.dot_dimension_numbers<[1], [0], [0], [1], [0, 0, 1, 1], [], []>} : vector<16x32xf32>, vector<32x192xf32>, vector<16x192xf32> -> vector<16x192xf32>
    %34 = vector.broadcast %22 : vector<1x192xf32> to vector<16x192xf32>
    %35 = arith.addf %33, %34 : vector<16x192xf32>
    %cst_12 = arith.constant 0.000000e+00 : f32
    %36 = vector.broadcast %cst_12 : f32 to vector<16x32xf32>
    %37 = vector.extract_strided_slice %35 {offsets = [0, 0], sizes = [16, 8], strides = [1, 1]} : vector<16x192xf32> to vector<16x8xf32>
    %38 = vector.extract_strided_slice %35 {offsets = [0, 32], sizes = [16, 8], strides = [1, 1]} : vector<16x192xf32> to vector<16x8xf32>
    %39 = vector.extract_strided_slice %35 {offsets = [0, 64], sizes = [16, 32], strides = [1, 1]} : vector<16x192xf32> to vector<16x32xf32>
    "tpu.trace_start"() <{level = 10 : i32, message = "qd,kd->qk"}> : () -> ()
    %cst_13 = arith.constant dense<0.000000e+00> : vector<16x16xf32>
    %40 = tpu.matmul %37, %38, %cst_13 {dimension_numbers = #tpu.dot_dimension_numbers<[1], [1], [0], [0], [0, 0, 1, 0], [], []>} : vector<16x8xf32>, vector<16x8xf32>, vector<16x16xf32> -> vector<16x16xf32>
    "tpu.trace_stop"() : () -> ()
    %cst_14 = arith.constant 0.353553385 : f32
    %41 = vector.broadcast %cst_14 : f32 to vector<16x16xf32>
    %42 = arith.mulf %40, %41 : vector<16x16xf32>
    %43 = arith.addf %42, %9 : vector<16x16xf32>
    %cst_15 = arith.constant dense<0xFF800000> : vector<16xf32>
    %44 = vector.multi_reduction <maximumf>, %43, %cst_15 [1] : vector<16x16xf32> to vector<16xf32>
    %45 = vector.shape_cast %44 : vector<16xf32> to vector<16x1xf32>
    %46 = vector.broadcast %45 : vector<16x1xf32> to vector<16x16xf32>
    %47 = arith.subf %43, %46 : vector<16x16xf32>
    %48 = math.exp %47 : vector<16x16xf32>
    %cst_16 = arith.constant dense<0.000000e+00> : vector<16xf32>
    %49 = vector.multi_reduction <add>, %48, %cst_16 [1] : vector<16x16xf32> to vector<16xf32>
    %50 = vector.shape_cast %49 : vector<16xf32> to vector<16x1xf32>
    %51 = tpu.reciprocal %50 {approx = true} : vector<16x1xf32> -> vector<16x1xf32>
    %52 = vector.broadcast %51 : vector<16x1xf32> to vector<16x16xf32>
    %53 = arith.mulf %48, %52 : vector<16x16xf32>
    %cst_17 = arith.constant dense<0.000000e+00> : vector<16x32xf32>
    %54 = tpu.matmul %53, %39, %cst_17 {dimension_numbers = #tpu.dot_dimension_numbers<[1], [0], [0], [1], [0, 0, 1, 1], [], []>} : vector<16x16xf32>, vector<16x32xf32>, vector<16x32xf32> -> vector<16x32xf32>
    %55 = arith.addf %36, %54 : vector<16x32xf32>
    %56 = vector.extract_strided_slice %35 {offsets = [0, 8], sizes = [16, 8], strides = [1, 1]} : vector<16x192xf32> to vector<16x8xf32>
    %57 = vector.extract_strided_slice %35 {offsets = [0, 40], sizes = [16, 8], strides = [1, 1]} : vector<16x192xf32> to vector<16x8xf32>
    %58 = vector.extract_strided_slice %35 {offsets = [0, 96], sizes = [16, 32], strides = [1, 1]} : vector<16x192xf32> to vector<16x32xf32>
    "tpu.trace_start"() <{level = 10 : i32, message = "qd,kd->qk"}> : () -> ()
    %cst_18 = arith.constant dense<0.000000e+00> : vector<16x16xf32>
    %59 = tpu.matmul %56, %57, %cst_18 {dimension_numbers = #tpu.dot_dimension_numbers<[1], [1], [0], [0], [0, 0, 1, 0], [], []>} : vector<16x8xf32>, vector<16x8xf32>, vector<16x16xf32> -> vector<16x16xf32>
    "tpu.trace_stop"() : () -> ()
    %cst_19 = arith.constant 0.353553385 : f32
    %60 = vector.broadcast %cst_19 : f32 to vector<16x16xf32>
    %61 = arith.mulf %59, %60 : vector<16x16xf32>
    %62 = arith.addf %61, %9 : vector<16x16xf32>
    %cst_20 = arith.constant dense<0xFF800000> : vector<16xf32>
    %63 = vector.multi_reduction <maximumf>, %62, %cst_20 [1] : vector<16x16xf32> to vector<16xf32>
    %64 = vector.shape_cast %63 : vector<16xf32> to vector<16x1xf32>
    %65 = vector.broadcast %64 : vector<16x1xf32> to vector<16x16xf32>
    %66 = arith.subf %62, %65 : vector<16x16xf32>
    %67 = math.exp %66 : vector<16x16xf32>
    %cst_21 = arith.constant dense<0.000000e+00> : vector<16xf32>
    %68 = vector.multi_reduction <add>, %67, %cst_21 [1] : vector<16x16xf32> to vector<16xf32>
    %69 = vector.shape_cast %68 : vector<16xf32> to vector<16x1xf32>
    %70 = tpu.reciprocal %69 {approx = true} : vector<16x1xf32> -> vector<16x1xf32>
    %71 = vector.broadcast %70 : vector<16x1xf32> to vector<16x16xf32>
    %72 = arith.mulf %67, %71 : vector<16x16xf32>
    %cst_22 = arith.constant dense<0.000000e+00> : vector<16x32xf32>
    %73 = tpu.matmul %72, %58, %cst_22 {dimension_numbers = #tpu.dot_dimension_numbers<[1], [0], [0], [1], [0, 0, 1, 1], [], []>} : vector<16x16xf32>, vector<16x32xf32>, vector<16x32xf32> -> vector<16x32xf32>
    %74 = arith.addf %55, %73 : vector<16x32xf32>
    %75 = vector.extract_strided_slice %35 {offsets = [0, 16], sizes = [16, 8], strides = [1, 1]} : vector<16x192xf32> to vector<16x8xf32>
    %76 = vector.extract_strided_slice %35 {offsets = [0, 48], sizes = [16, 8], strides = [1, 1]} : vector<16x192xf32> to vector<16x8xf32>
    %77 = vector.extract_strided_slice %35 {offsets = [0, 128], sizes = [16, 32], strides = [1, 1]} : vector<16x192xf32> to vector<16x32xf32>
    "tpu.trace_start"() <{level = 10 : i32, message = "qd,kd->qk"}> : () -> ()
    %cst_23 = arith.constant dense<0.000000e+00> : vector<16x16xf32>
    %78 = tpu.matmul %75, %76, %cst_23 {dimension_numbers = #tpu.dot_dimension_numbers<[1], [1], [0], [0], [0, 0, 1, 0], [], []>} : vector<16x8xf32>, vector<16x8xf32>, vector<16x16xf32> -> vector<16x16xf32>
    "tpu.trace_stop"() : () -> ()
    %cst_24 = arith.constant 0.353553385 : f32
    %79 = vector.broadcast %cst_24 : f32 to vector<16x16xf32>
    %80 = arith.mulf %78, %79 : vector<16x16xf32>
    %81 = arith.addf %80, %9 : vector<16x16xf32>
    %cst_25 = arith.constant dense<0xFF800000> : vector<16xf32>
    %82 = vector.multi_reduction <maximumf>, %81, %cst_25 [1] : vector<16x16xf32> to vector<16xf32>
    %83 = vector.shape_cast %82 : vector<16xf32> to vector<16x1xf32>
    %84 = vector.broadcast %83 : vector<16x1xf32> to vector<16x16xf32>
    %85 = arith.subf %81, %84 : vector<16x16xf32>
    %86 = math.exp %85 : vector<16x16xf32>
    %cst_26 = arith.constant dense<0.000000e+00> : vector<16xf32>
    %87 = vector.multi_reduction <add>, %86, %cst_26 [1] : vector<16x16xf32> to vector<16xf32>
    %88 = vector.shape_cast %87 : vector<16xf32> to vector<16x1xf32>
    %89 = tpu.reciprocal %88 {approx = true} : vector<16x1xf32> -> vector<16x1xf32>
    %90 = vector.broadcast %89 : vector<16x1xf32> to vector<16x16xf32>
    %91 = arith.mulf %86, %90 : vector<16x16xf32>
    %cst_27 = arith.constant dense<0.000000e+00> : vector<16x32xf32>
    %92 = tpu.matmul %91, %77, %cst_27 {dimension_numbers = #tpu.dot_dimension_numbers<[1], [0], [0], [1], [0, 0, 1, 1], [], []>} : vector<16x16xf32>, vector<16x32xf32>, vector<16x32xf32> -> vector<16x32xf32>
    %93 = arith.addf %74, %92 : vector<16x32xf32>
    %94 = vector.extract_strided_slice %35 {offsets = [0, 24], sizes = [16, 8], strides = [1, 1]} : vector<16x192xf32> to vector<16x8xf32>
    %95 = vector.extract_strided_slice %35 {offsets = [0, 56], sizes = [16, 8], strides = [1, 1]} : vector<16x192xf32> to vector<16x8xf32>
    %96 = vector.extract_strided_slice %35 {offsets = [0, 160], sizes = [16, 32], strides = [1, 1]} : vector<16x192xf32> to vector<16x32xf32>
    "tpu.trace_start"() <{level = 10 : i32, message = "qd,kd->qk"}> : () -> ()
    %cst_28 = arith.constant dense<0.000000e+00> : vector<16x16xf32>
    %97 = tpu.matmul %94, %95, %cst_28 {dimension_numbers = #tpu.dot_dimension_numbers<[1], [1], [0], [0], [0, 0, 1, 0], [], []>} : vector<16x8xf32>, vector<16x8xf32>, vector<16x16xf32> -> vector<16x16xf32>
    "tpu.trace_stop"() : () -> ()
    %cst_29 = arith.constant 0.353553385 : f32
    %98 = vector.broadcast %cst_29 : f32 to vector<16x16xf32>
    %99 = arith.mulf %97, %98 : vector<16x16xf32>
    %100 = arith.addf %99, %9 : vector<16x16xf32>
    %cst_30 = arith.constant dense<0xFF800000> : vector<16xf32>
    %101 = vector.multi_reduction <maximumf>, %100, %cst_30 [1] : vector<16x16xf32> to vector<16xf32>
    %102 = vector.shape_cast %101 : vector<16xf32> to vector<16x1xf32>
    %103 = vector.broadcast %102 : vector<16x1xf32> to vector<16x16xf32>
    %104 = arith.subf %100, %103 : vector<16x16xf32>
    %105 = math.exp %104 : vector<16x16xf32>
    %cst_31 = arith.constant dense<0.000000e+00> : vector<16xf32>
    %106 = vector.multi_reduction <add>, %105, %cst_31 [1] : vector<16x16xf32> to vector<16xf32>
    %107 = vector.shape_cast %106 : vector<16xf32> to vector<16x1xf32>
    %108 = tpu.reciprocal %107 {approx = true} : vector<16x1xf32> -> vector<16x1xf32>
    %109 = vector.broadcast %108 : vector<16x1xf32> to vector<16x16xf32>
    %110 = arith.mulf %105, %109 : vector<16x16xf32>
    %cst_32 = arith.constant dense<0.000000e+00> : vector<16x32xf32>
    %111 = tpu.matmul %110, %96, %cst_32 {dimension_numbers = #tpu.dot_dimension_numbers<[1], [0], [0], [1], [0, 0, 1, 1], [], []>} : vector<16x16xf32>, vector<16x32xf32>, vector<16x32xf32> -> vector<16x32xf32>
    %112 = arith.addf %93, %111 : vector<16x32xf32>
    %113 = vector.broadcast %23 : vector<1x32xf32> to vector<16x32xf32>
    %114 = arith.addf %112, %113 : vector<16x32xf32>
    %115 = arith.addf %20, %114 : vector<16x32xf32>
    %cst_33 = arith.constant dense<0.000000e+00> : vector<16xf32>
    %116 = vector.multi_reduction <add>, %115, %cst_33 [1] : vector<16x32xf32> to vector<16xf32>
    %117 = vector.shape_cast %116 : vector<16xf32> to vector<16x1xf32>
    %cst_34 = arith.constant 3.200000e+01 : f32
    %118 = vector.broadcast %cst_34 : f32 to vector<16x1xf32>
    %119 = arith.divf %117, %118 : vector<16x1xf32>
    %120 = vector.broadcast %119 : vector<16x1xf32> to vector<16x32xf32>
    %121 = arith.subf %115, %120 : vector<16x32xf32>
    %122 = arith.mulf %121, %121 : vector<16x32xf32>
    %cst_35 = arith.constant dense<0.000000e+00> : vector<16xf32>
    %123 = vector.multi_reduction <add>, %122, %cst_35 [1] : vector<16x32xf32> to vector<16xf32>
    %124 = vector.shape_cast %123 : vector<16xf32> to vector<16x1xf32>
    %cst_36 = arith.constant 3.200000e+01 : f32
    %125 = vector.broadcast %cst_36 : f32 to vector<16x1xf32>
    %126 = arith.divf %124, %125 : vector<16x1xf32>
    %cst_37 = arith.constant 9.99999974E-6 : f32
    %127 = vector.broadcast %cst_37 : f32 to vector<16x1xf32>
    %128 = arith.addf %126, %127 : vector<16x1xf32>
    %129 = math.rsqrt %128 : vector<16x1xf32>
    %130 = vector.broadcast %129 : vector<16x1xf32> to vector<16x32xf32>
    %131 = arith.mulf %121, %130 : vector<16x32xf32>
    %132 = vector.broadcast %24 : vector<1x32xf32> to vector<16x32xf32>
    %133 = arith.mulf %131, %132 : vector<16x32xf32>
    %134 = vector.broadcast %25 : vector<1x32xf32> to vector<16x32xf32>
    %135 = arith.addf %133, %134 : vector<16x32xf32>
    %cst_38 = arith.constant dense<0.000000e+00> : vector<16x64xf32>
    %136 = tpu.matmul %135, %31, %cst_38 {dimension_numbers = #tpu.dot_dimension_numbers<[1], [0], [0], [1], [0, 0, 1, 1], [], []>} : vector<16x32xf32>, vector<32x64xf32>, vector<16x64xf32> -> vector<16x64xf32>
    %137 = vector.broadcast %26 : vector<1x64xf32> to vector<16x64xf32>
    %138 = arith.addf %136, %137 : vector<16x64xf32>
    %cst_39 = arith.constant 0.000000e+00 : f32
    %139 = vector.broadcast %cst_39 : f32 to vector<16x64xf32>
    %140 = arith.maximumf %138, %139 : vector<16x64xf32>
    %cst_40 = arith.constant dense<0.000000e+00> : vector<16x32xf32>
    %141 = tpu.matmul %140, %32, %cst_40 {dimension_numbers = #tpu.dot_dimension_numbers<[1], [0], [0], [1], [0, 0, 1, 1], [], []>} : vector<16x64xf32>, vector<64x32xf32>, vector<16x32xf32> -> vector<16x32xf32>
    %142 = vector.broadcast %27 : vector<1x32xf32> to vector<16x32xf32>
    %143 = arith.addf %141, %142 : vector<16x32xf32>
    %144 = arith.addf %135, %143 : vector<16x32xf32>
    %cst_41 = arith.constant dense<0.000000e+00> : vector<16xf32>
    %145 = vector.multi_reduction <add>, %144, %cst_41 [1] : vector<16x32xf32> to vector<16xf32>
    %146 = vector.shape_cast %145 : vector<16xf32> to vector<16x1xf32>
    %cst_42 = arith.constant 3.200000e+01 : f32
    %147 = vector.broadcast %cst_42 : f32 to vector<16x1xf32>
    %148 = arith.divf %146, %147 : vector<16x1xf32>
    %149 = vector.broadcast %148 : vector<16x1xf32> to vector<16x32xf32>
    %150 = arith.subf %144, %149 : vector<16x32xf32>
    %151 = arith.mulf %150, %150 : vector<16x32xf32>
    %cst_43 = arith.constant dense<0.000000e+00> : vector<16xf32>
    %152 = vector.multi_reduction <add>, %151, %cst_43 [1] : vector<16x32xf32> to vector<16xf32>
    %153 = vector.shape_cast %152 : vector<16xf32> to vector<16x1xf32>
    %cst_44 = arith.constant 3.200000e+01 : f32
    %154 = vector.broadcast %cst_44 : f32 to vector<16x1xf32>
    %155 = arith.divf %153, %154 : vector<16x1xf32>
    %cst_45 = arith.constant 9.99999974E-6 : f32
    %156 = vector.broadcast %cst_45 : f32 to vector<16x1xf32>
    %157 = arith.addf %155, %156 : vector<16x1xf32>
    %158 = math.rsqrt %157 : vector<16x1xf32>
    %159 = vector.broadcast %158 : vector<16x1xf32> to vector<16x32xf32>
    %160 = arith.mulf %150, %159 : vector<16x32xf32>
    %161 = vector.broadcast %28 : vector<1x32xf32> to vector<16x32xf32>
    %162 = arith.mulf %160, %161 : vector<16x32xf32>
    %163 = vector.broadcast %29 : vector<1x32xf32> to vector<16x32xf32>
    %164 = arith.addf %162, %163 : vector<16x32xf32>
    %c208 = arith.constant 208 : index
    %c0_46 = arith.constant 0 : index
    %165 = vector.load %arg1[%c208, %c0_46] : memref<384x192xf32, #tpu.memory_space<vmem>>, vector<8x192xf32>
    %166 = vector.extract_strided_slice %165 {offsets = [0, 0], sizes = [1, 192], strides = [1, 1]} : vector<8x192xf32> to vector<1x192xf32>
    %167 = vector.extract_strided_slice %165 {offsets = [1, 0], sizes = [1, 32], strides = [1, 1]} : vector<8x192xf32> to vector<1x32xf32>
    %168 = vector.extract_strided_slice %165 {offsets = [2, 0], sizes = [1, 32], strides = [1, 1]} : vector<8x192xf32> to vector<1x32xf32>
    %169 = vector.extract_strided_slice %165 {offsets = [3, 0], sizes = [1, 32], strides = [1, 1]} : vector<8x192xf32> to vector<1x32xf32>
    %170 = vector.extract_strided_slice %165 {offsets = [4, 0], sizes = [1, 64], strides = [1, 1]} : vector<8x192xf32> to vector<1x64xf32>
    %171 = vector.extract_strided_slice %165 {offsets = [5, 0], sizes = [1, 32], strides = [1, 1]} : vector<8x192xf32> to vector<1x32xf32>
    %172 = vector.extract_strided_slice %165 {offsets = [6, 0], sizes = [1, 32], strides = [1, 1]} : vector<8x192xf32> to vector<1x32xf32>
    %173 = vector.extract_strided_slice %165 {offsets = [7, 0], sizes = [1, 32], strides = [1, 1]} : vector<8x192xf32> to vector<1x32xf32>
    %c216 = arith.constant 216 : index
    %c0_47 = arith.constant 0 : index
    %174 = vector.load %arg1[%c216, %c0_47] : memref<384x192xf32, #tpu.memory_space<vmem>>, vector<32x192xf32>
    %c248 = arith.constant 248 : index
    %c0_48 = arith.constant 0 : index
    %175 = vector.load %arg1[%c248, %c0_48] : memref<384x192xf32, #tpu.memory_space<vmem>>, vector<32x64xf32>
    %c280 = arith.constant 280 : index
    %c0_49 = arith.constant 0 : index
    %176 = vector.load %arg1[%c280, %c0_49] : memref<384x192xf32, #tpu.memory_space<vmem>>, vector<64x32xf32>
    %cst_50 = arith.constant dense<0.000000e+00> : vector<16x192xf32>
    %177 = tpu.matmul %164, %174, %cst_50 {dimension_numbers = #tpu.dot_dimension_numbers<[1], [0], [0], [1], [0, 0, 1, 1], [], []>} : vector<16x32xf32>, vector<32x192xf32>, vector<16x192xf32> -> vector<16x192xf32>
    %178 = vector.broadcast %166 : vector<1x192xf32> to vector<16x192xf32>
    %179 = arith.addf %177, %178 : vector<16x192xf32>
    %cst_51 = arith.constant 0.000000e+00 : f32
    %180 = vector.broadcast %cst_51 : f32 to vector<16x32xf32>
    %181 = vector.extract_strided_slice %179 {offsets = [0, 0], sizes = [16, 8], strides = [1, 1]} : vector<16x192xf32> to vector<16x8xf32>
    %182 = vector.extract_strided_slice %179 {offsets = [0, 32], sizes = [16, 8], strides = [1, 1]} : vector<16x192xf32> to vector<16x8xf32>
    %183 = vector.extract_strided_slice %179 {offsets = [0, 64], sizes = [16, 32], strides = [1, 1]} : vector<16x192xf32> to vector<16x32xf32>
    "tpu.trace_start"() <{level = 10 : i32, message = "qd,kd->qk"}> : () -> ()
    %cst_52 = arith.constant dense<0.000000e+00> : vector<16x16xf32>
    %184 = tpu.matmul %181, %182, %cst_52 {dimension_numbers = #tpu.dot_dimension_numbers<[1], [1], [0], [0], [0, 0, 1, 0], [], []>} : vector<16x8xf32>, vector<16x8xf32>, vector<16x16xf32> -> vector<16x16xf32>
    "tpu.trace_stop"() : () -> ()
    %cst_53 = arith.constant 0.353553385 : f32
    %185 = vector.broadcast %cst_53 : f32 to vector<16x16xf32>
    %186 = arith.mulf %184, %185 : vector<16x16xf32>
    %187 = arith.addf %186, %9 : vector<16x16xf32>
    %cst_54 = arith.constant dense<0xFF800000> : vector<16xf32>
    %188 = vector.multi_reduction <maximumf>, %187, %cst_54 [1] : vector<16x16xf32> to vector<16xf32>
    %189 = vector.shape_cast %188 : vector<16xf32> to vector<16x1xf32>
    %190 = vector.broadcast %189 : vector<16x1xf32> to vector<16x16xf32>
    %191 = arith.subf %187, %190 : vector<16x16xf32>
    %192 = math.exp %191 : vector<16x16xf32>
    %cst_55 = arith.constant dense<0.000000e+00> : vector<16xf32>
    %193 = vector.multi_reduction <add>, %192, %cst_55 [1] : vector<16x16xf32> to vector<16xf32>
    %194 = vector.shape_cast %193 : vector<16xf32> to vector<16x1xf32>
    %195 = tpu.reciprocal %194 {approx = true} : vector<16x1xf32> -> vector<16x1xf32>
    %196 = vector.broadcast %195 : vector<16x1xf32> to vector<16x16xf32>
    %197 = arith.mulf %192, %196 : vector<16x16xf32>
    %cst_56 = arith.constant dense<0.000000e+00> : vector<16x32xf32>
    %198 = tpu.matmul %197, %183, %cst_56 {dimension_numbers = #tpu.dot_dimension_numbers<[1], [0], [0], [1], [0, 0, 1, 1], [], []>} : vector<16x16xf32>, vector<16x32xf32>, vector<16x32xf32> -> vector<16x32xf32>
    %199 = arith.addf %180, %198 : vector<16x32xf32>
    %200 = vector.extract_strided_slice %179 {offsets = [0, 8], sizes = [16, 8], strides = [1, 1]} : vector<16x192xf32> to vector<16x8xf32>
    %201 = vector.extract_strided_slice %179 {offsets = [0, 40], sizes = [16, 8], strides = [1, 1]} : vector<16x192xf32> to vector<16x8xf32>
    %202 = vector.extract_strided_slice %179 {offsets = [0, 96], sizes = [16, 32], strides = [1, 1]} : vector<16x192xf32> to vector<16x32xf32>
    "tpu.trace_start"() <{level = 10 : i32, message = "qd,kd->qk"}> : () -> ()
    %cst_57 = arith.constant dense<0.000000e+00> : vector<16x16xf32>
    %203 = tpu.matmul %200, %201, %cst_57 {dimension_numbers = #tpu.dot_dimension_numbers<[1], [1], [0], [0], [0, 0, 1, 0], [], []>} : vector<16x8xf32>, vector<16x8xf32>, vector<16x16xf32> -> vector<16x16xf32>
    "tpu.trace_stop"() : () -> ()
    %cst_58 = arith.constant 0.353553385 : f32
    %204 = vector.broadcast %cst_58 : f32 to vector<16x16xf32>
    %205 = arith.mulf %203, %204 : vector<16x16xf32>
    %206 = arith.addf %205, %9 : vector<16x16xf32>
    %cst_59 = arith.constant dense<0xFF800000> : vector<16xf32>
    %207 = vector.multi_reduction <maximumf>, %206, %cst_59 [1] : vector<16x16xf32> to vector<16xf32>
    %208 = vector.shape_cast %207 : vector<16xf32> to vector<16x1xf32>
    %209 = vector.broadcast %208 : vector<16x1xf32> to vector<16x16xf32>
    %210 = arith.subf %206, %209 : vector<16x16xf32>
    %211 = math.exp %210 : vector<16x16xf32>
    %cst_60 = arith.constant dense<0.000000e+00> : vector<16xf32>
    %212 = vector.multi_reduction <add>, %211, %cst_60 [1] : vector<16x16xf32> to vector<16xf32>
    %213 = vector.shape_cast %212 : vector<16xf32> to vector<16x1xf32>
    %214 = tpu.reciprocal %213 {approx = true} : vector<16x1xf32> -> vector<16x1xf32>
    %215 = vector.broadcast %214 : vector<16x1xf32> to vector<16x16xf32>
    %216 = arith.mulf %211, %215 : vector<16x16xf32>
    %cst_61 = arith.constant dense<0.000000e+00> : vector<16x32xf32>
    %217 = tpu.matmul %216, %202, %cst_61 {dimension_numbers = #tpu.dot_dimension_numbers<[1], [0], [0], [1], [0, 0, 1, 1], [], []>} : vector<16x16xf32>, vector<16x32xf32>, vector<16x32xf32> -> vector<16x32xf32>
    %218 = arith.addf %199, %217 : vector<16x32xf32>
    %219 = vector.extract_strided_slice %179 {offsets = [0, 16], sizes = [16, 8], strides = [1, 1]} : vector<16x192xf32> to vector<16x8xf32>
    %220 = vector.extract_strided_slice %179 {offsets = [0, 48], sizes = [16, 8], strides = [1, 1]} : vector<16x192xf32> to vector<16x8xf32>
    %221 = vector.extract_strided_slice %179 {offsets = [0, 128], sizes = [16, 32], strides = [1, 1]} : vector<16x192xf32> to vector<16x32xf32>
    "tpu.trace_start"() <{level = 10 : i32, message = "qd,kd->qk"}> : () -> ()
    %cst_62 = arith.constant dense<0.000000e+00> : vector<16x16xf32>
    %222 = tpu.matmul %219, %220, %cst_62 {dimension_numbers = #tpu.dot_dimension_numbers<[1], [1], [0], [0], [0, 0, 1, 0], [], []>} : vector<16x8xf32>, vector<16x8xf32>, vector<16x16xf32> -> vector<16x16xf32>
    "tpu.trace_stop"() : () -> ()
    %cst_63 = arith.constant 0.353553385 : f32
    %223 = vector.broadcast %cst_63 : f32 to vector<16x16xf32>
    %224 = arith.mulf %222, %223 : vector<16x16xf32>
    %225 = arith.addf %224, %9 : vector<16x16xf32>
    %cst_64 = arith.constant dense<0xFF800000> : vector<16xf32>
    %226 = vector.multi_reduction <maximumf>, %225, %cst_64 [1] : vector<16x16xf32> to vector<16xf32>
    %227 = vector.shape_cast %226 : vector<16xf32> to vector<16x1xf32>
    %228 = vector.broadcast %227 : vector<16x1xf32> to vector<16x16xf32>
    %229 = arith.subf %225, %228 : vector<16x16xf32>
    %230 = math.exp %229 : vector<16x16xf32>
    %cst_65 = arith.constant dense<0.000000e+00> : vector<16xf32>
    %231 = vector.multi_reduction <add>, %230, %cst_65 [1] : vector<16x16xf32> to vector<16xf32>
    %232 = vector.shape_cast %231 : vector<16xf32> to vector<16x1xf32>
    %233 = tpu.reciprocal %232 {approx = true} : vector<16x1xf32> -> vector<16x1xf32>
    %234 = vector.broadcast %233 : vector<16x1xf32> to vector<16x16xf32>
    %235 = arith.mulf %230, %234 : vector<16x16xf32>
    %cst_66 = arith.constant dense<0.000000e+00> : vector<16x32xf32>
    %236 = tpu.matmul %235, %221, %cst_66 {dimension_numbers = #tpu.dot_dimension_numbers<[1], [0], [0], [1], [0, 0, 1, 1], [], []>} : vector<16x16xf32>, vector<16x32xf32>, vector<16x32xf32> -> vector<16x32xf32>
    %237 = arith.addf %218, %236 : vector<16x32xf32>
    %238 = vector.extract_strided_slice %179 {offsets = [0, 24], sizes = [16, 8], strides = [1, 1]} : vector<16x192xf32> to vector<16x8xf32>
    %239 = vector.extract_strided_slice %179 {offsets = [0, 56], sizes = [16, 8], strides = [1, 1]} : vector<16x192xf32> to vector<16x8xf32>
    %240 = vector.extract_strided_slice %179 {offsets = [0, 160], sizes = [16, 32], strides = [1, 1]} : vector<16x192xf32> to vector<16x32xf32>
    "tpu.trace_start"() <{level = 10 : i32, message = "qd,kd->qk"}> : () -> ()
    %cst_67 = arith.constant dense<0.000000e+00> : vector<16x16xf32>
    %241 = tpu.matmul %238, %239, %cst_67 {dimension_numbers = #tpu.dot_dimension_numbers<[1], [1], [0], [0], [0, 0, 1, 0], [], []>} : vector<16x8xf32>, vector<16x8xf32>, vector<16x16xf32> -> vector<16x16xf32>
    "tpu.trace_stop"() : () -> ()
    %cst_68 = arith.constant 0.353553385 : f32
    %242 = vector.broadcast %cst_68 : f32 to vector<16x16xf32>
    %243 = arith.mulf %241, %242 : vector<16x16xf32>
    %244 = arith.addf %243, %9 : vector<16x16xf32>
    %cst_69 = arith.constant dense<0xFF800000> : vector<16xf32>
    %245 = vector.multi_reduction <maximumf>, %244, %cst_69 [1] : vector<16x16xf32> to vector<16xf32>
    %246 = vector.shape_cast %245 : vector<16xf32> to vector<16x1xf32>
    %247 = vector.broadcast %246 : vector<16x1xf32> to vector<16x16xf32>
    %248 = arith.subf %244, %247 : vector<16x16xf32>
    %249 = math.exp %248 : vector<16x16xf32>
    %cst_70 = arith.constant dense<0.000000e+00> : vector<16xf32>
    %250 = vector.multi_reduction <add>, %249, %cst_70 [1] : vector<16x16xf32> to vector<16xf32>
    %251 = vector.shape_cast %250 : vector<16xf32> to vector<16x1xf32>
    %252 = tpu.reciprocal %251 {approx = true} : vector<16x1xf32> -> vector<16x1xf32>
    %253 = vector.broadcast %252 : vector<16x1xf32> to vector<16x16xf32>
    %254 = arith.mulf %249, %253 : vector<16x16xf32>
    %cst_71 = arith.constant dense<0.000000e+00> : vector<16x32xf32>
    %255 = tpu.matmul %254, %240, %cst_71 {dimension_numbers = #tpu.dot_dimension_numbers<[1], [0], [0], [1], [0, 0, 1, 1], [], []>} : vector<16x16xf32>, vector<16x32xf32>, vector<16x32xf32> -> vector<16x32xf32>
    %256 = arith.addf %237, %255 : vector<16x32xf32>
    %257 = vector.broadcast %167 : vector<1x32xf32> to vector<16x32xf32>
    %258 = arith.addf %256, %257 : vector<16x32xf32>
    %259 = arith.addf %164, %258 : vector<16x32xf32>
    %cst_72 = arith.constant dense<0.000000e+00> : vector<16xf32>
    %260 = vector.multi_reduction <add>, %259, %cst_72 [1] : vector<16x32xf32> to vector<16xf32>
    %261 = vector.shape_cast %260 : vector<16xf32> to vector<16x1xf32>
    %cst_73 = arith.constant 3.200000e+01 : f32
    %262 = vector.broadcast %cst_73 : f32 to vector<16x1xf32>
    %263 = arith.divf %261, %262 : vector<16x1xf32>
    %264 = vector.broadcast %263 : vector<16x1xf32> to vector<16x32xf32>
    %265 = arith.subf %259, %264 : vector<16x32xf32>
    %266 = arith.mulf %265, %265 : vector<16x32xf32>
    %cst_74 = arith.constant dense<0.000000e+00> : vector<16xf32>
    %267 = vector.multi_reduction <add>, %266, %cst_74 [1] : vector<16x32xf32> to vector<16xf32>
    %268 = vector.shape_cast %267 : vector<16xf32> to vector<16x1xf32>
    %cst_75 = arith.constant 3.200000e+01 : f32
    %269 = vector.broadcast %cst_75 : f32 to vector<16x1xf32>
    %270 = arith.divf %268, %269 : vector<16x1xf32>
    %cst_76 = arith.constant 9.99999974E-6 : f32
    %271 = vector.broadcast %cst_76 : f32 to vector<16x1xf32>
    %272 = arith.addf %270, %271 : vector<16x1xf32>
    %273 = math.rsqrt %272 : vector<16x1xf32>
    %274 = vector.broadcast %273 : vector<16x1xf32> to vector<16x32xf32>
    %275 = arith.mulf %265, %274 : vector<16x32xf32>
    %276 = vector.broadcast %168 : vector<1x32xf32> to vector<16x32xf32>
    %277 = arith.mulf %275, %276 : vector<16x32xf32>
    %278 = vector.broadcast %169 : vector<1x32xf32> to vector<16x32xf32>
    %279 = arith.addf %277, %278 : vector<16x32xf32>
    %cst_77 = arith.constant dense<0.000000e+00> : vector<16x64xf32>
    %280 = tpu.matmul %279, %175, %cst_77 {dimension_numbers = #tpu.dot_dimension_numbers<[1], [0], [0], [1], [0, 0, 1, 1], [], []>} : vector<16x32xf32>, vector<32x64xf32>, vector<16x64xf32> -> vector<16x64xf32>
    %281 = vector.broadcast %170 : vector<1x64xf32> to vector<16x64xf32>
    %282 = arith.addf %280, %281 : vector<16x64xf32>
    %cst_78 = arith.constant 0.000000e+00 : f32
    %283 = vector.broadcast %cst_78 : f32 to vector<16x64xf32>
    %284 = arith.maximumf %282, %283 : vector<16x64xf32>
    %cst_79 = arith.constant dense<0.000000e+00> : vector<16x32xf32>
    %285 = tpu.matmul %284, %176, %cst_79 {dimension_numbers = #tpu.dot_dimension_numbers<[1], [0], [0], [1], [0, 0, 1, 1], [], []>} : vector<16x64xf32>, vector<64x32xf32>, vector<16x32xf32> -> vector<16x32xf32>
    %286 = vector.broadcast %171 : vector<1x32xf32> to vector<16x32xf32>
    %287 = arith.addf %285, %286 : vector<16x32xf32>
    %288 = arith.addf %279, %287 : vector<16x32xf32>
    %cst_80 = arith.constant dense<0.000000e+00> : vector<16xf32>
    %289 = vector.multi_reduction <add>, %288, %cst_80 [1] : vector<16x32xf32> to vector<16xf32>
    %290 = vector.shape_cast %289 : vector<16xf32> to vector<16x1xf32>
    %cst_81 = arith.constant 3.200000e+01 : f32
    %291 = vector.broadcast %cst_81 : f32 to vector<16x1xf32>
    %292 = arith.divf %290, %291 : vector<16x1xf32>
    %293 = vector.broadcast %292 : vector<16x1xf32> to vector<16x32xf32>
    %294 = arith.subf %288, %293 : vector<16x32xf32>
    %295 = arith.mulf %294, %294 : vector<16x32xf32>
    %cst_82 = arith.constant dense<0.000000e+00> : vector<16xf32>
    %296 = vector.multi_reduction <add>, %295, %cst_82 [1] : vector<16x32xf32> to vector<16xf32>
    %297 = vector.shape_cast %296 : vector<16xf32> to vector<16x1xf32>
    %cst_83 = arith.constant 3.200000e+01 : f32
    %298 = vector.broadcast %cst_83 : f32 to vector<16x1xf32>
    %299 = arith.divf %297, %298 : vector<16x1xf32>
    %cst_84 = arith.constant 9.99999974E-6 : f32
    %300 = vector.broadcast %cst_84 : f32 to vector<16x1xf32>
    %301 = arith.addf %299, %300 : vector<16x1xf32>
    %302 = math.rsqrt %301 : vector<16x1xf32>
    %303 = vector.broadcast %302 : vector<16x1xf32> to vector<16x32xf32>
    %304 = arith.mulf %294, %303 : vector<16x32xf32>
    %305 = vector.broadcast %172 : vector<1x32xf32> to vector<16x32xf32>
    %306 = arith.mulf %304, %305 : vector<16x32xf32>
    %307 = vector.broadcast %173 : vector<1x32xf32> to vector<16x32xf32>
    %308 = arith.addf %306, %307 : vector<16x32xf32>
    %c352 = arith.constant 352 : index
    %c0_85 = arith.constant 0 : index
    %309 = vector.load %arg1[%c352, %c0_85] : memref<384x192xf32, #tpu.memory_space<vmem>>, vector<32x128xf32>
    %c344 = arith.constant 344 : index
    %c0_86 = arith.constant 0 : index
    %310 = vector.load %arg1[%c344, %c0_86] : memref<384x192xf32, #tpu.memory_space<vmem>>, vector<1x128xf32>
    %cst_87 = arith.constant dense<0.000000e+00> : vector<16x128xf32>
    %311 = tpu.matmul %308, %309, %cst_87 {dimension_numbers = #tpu.dot_dimension_numbers<[1], [0], [0], [1], [0, 0, 1, 1], [], []>} : vector<16x32xf32>, vector<32x128xf32>, vector<16x128xf32> -> vector<16x128xf32>
    %312 = vector.broadcast %310 : vector<1x128xf32> to vector<16x128xf32>
    %313 = arith.addf %311, %312 : vector<16x128xf32>
    %c0_88 = arith.constant 0 : index
    %c0_89 = arith.constant 0 : index
    %314 = vector.load %arg2[%c0_88, %c0_89] : memref<16x128xf32, #tpu.memory_space<vmem>>, vector<16x128xf32>
    tpu.vector_store %arg2[%c0_88, %c0_89], %313 {strides = array<i32>} : memref<16x128xf32, #tpu.memory_space<vmem>>, vector<16x128xf32>,
    return
  }
}

</mosaic_0001>

<llo_original>
// kernel: custom_transformer_forward.1
$region0: #{custom_transformer_forward.1}
  #allocation0 [shape = 'u32[]', space=smem, size = 0x4, offset = 0x4, fixed_abs, tag = 'smem constant byte address 0x4 - core index']
  #allocation1 [shape = 'u32[72,128]{1,0:T(1,128)}', space=vmem, size = 0x9000, scoped, tag = 'internal scratch']
  %s0 = inlined_call_operand.vmem [shape: s32[16,1], index: 0, kind: input, shape index: {}]
  %s1 = inlined_call_operand.vmem [shape: f32[384,192], index: 1, kind: input, shape index: {}]
  %s2 = inlined_call_operand.vmem [shape: f32[16,128], index: 2, kind: output, shape index: {}]
  %s3 = sld [smem:[#allocation0]]
  $region18: #{custom_transformer_forward.1} parent=0
    _
  %s5 = ssub.s32 1, %s3
  %s6 = scalar_select 0, %s5, %s3
  // Predicated region
  $region2: #{custom_transformer_forward.1} parent=0 // pred_check
    _
  $region3: #{custom_transformer_forward.1} parent=0 // pred_check_branch
    %8 = sbr.rel (0) target = $region5
  $region4: #{custom_transformer_forward.1} parent=0 // pred_region
    _
  $region5: #{custom_transformer_forward.1} parent=0 // pred_fallthru
    _
  // Predicated region
  $region6: #{custom_transformer_forward.1} parent=0 // pred_check
    _
  $region7: #{custom_transformer_forward.1} parent=0 // pred_check_branch
    %10 = sbr.rel (0) target = $region9
  $region8: #{custom_transformer_forward.1} parent=0 // pred_region
    _
  $region9: #{custom_transformer_forward.1} parent=0 // pred_fallthru
    _
  %v11 = vlaneseq
  %v12 = vshrl.u32 %v11, 7
  %v13 = vadd.s32 %v12, 8
  %v14 = vlaneseq
  %v15 = vand.u32 %v14, 127
  %v16 = vand.u32 %v12, 4294967288
  %v17 = vand.u32 %v13, 4294967288
  %v18 = vand.u32 %v15, 4294967288
  %vm19 = vcmp.eq.s32.totalorder %v16, %v18
  %vm20 = vcmp.eq.s32.totalorder %v17, %v18
  %v21 = vsel %vm19, 0.0, -1e+30
  %v22 = vsel %vm20, 0.0, -1e+30
  %v23 = vld [vmem:[%s0] sm:$0xff]
  %v24 = vld [vmem:[%s0 + $0x8] sm:$0xff]
  %25 = vset.pattern.permute.xlu0 0
  %26 = vperm.xlu0 %25, %v23
  %v27 = vpop.permute.xlu0 %26
  %28 = vset.pattern.permute.xlu0 0
  %29 = vperm.xlu0 %28, %v24
  %v30 = vpop.permute.xlu0 %29
  %vm31 = vcmp.eq.s32.totalorder %v15, %v27
  %vm32 = vcmp.eq.s32.totalorder %v15, %v30
  %v33 = vsel %vm31, 1, 0
  %v34 = vsel %vm32, 1, 0
  %v35 = vcvt.s32.f32 %v33
  %v36 = vcvt.s32.f32 %v34
  %v37 = vld [vmem:[%s1] sm:$0xff]
  %v38 = vld [vmem:[%s1 + $0x10] sm:$0xff]
  %v39 = vld [vmem:[%s1 + $0x20] sm:$0xff]
  %v40 = vld [vmem:[%s1 + $0x30] sm:$0xff]
  %v41 = vld [vmem:[%s1 + $0x40] sm:$0xff]
  %v42 = vld [vmem:[%s1 + $0x50] sm:$0xff]
  %v43 = vld [vmem:[%s1 + $0x60] sm:$0xff]
  %v44 = vld [vmem:[%s1 + $0x70] sm:$0xff]
  %v45 = vld [vmem:[%s1 + $0x80] sm:$0xff]
  %vm46 = vcmask 523264
  %v48 = vsel %vm46, %v35, 0
  %v51 = vsel %vm46, %v36, 0
  %53 = vmatpush.msra.mxu0 0.0
  %54 = vmatpush.msra.mxu0 0.0
  %55 = vmatpush.msra.mxu0 0.0
  %56 = vmatpush.msra.mxu0 0.0
  %57 = vmatpush.msra.mxu0 0.0
  %58 = vmatpush.msra.mxu0 0.0
  %59 = vmatpush.msra.mxu0 0.0
  %60 = vmatpush.msra.mxu0 0.0
  %61 = vmatpush.msra.mxu0 %v44
  %62 = vmatpush.msra.mxu0 %v43
  %63 = vmatpush.msra.mxu0 %v42
  %64 = vmatpush.msra.mxu0 %v41
  %65 = vmatpush.msra.mxu0 %v40
  %66 = vmatpush.msra.mxu0 %v39
  %67 = vmatpush.msra.mxu0 %v38
  %68 = vmatpush.msra.mxu0 %v37
  %69 = vmatmul.f32.gmra.mxu0 %v48
  %v70 = vpop.f32.mrf.mxu0
  %v71 = vadd.f32 %v45, %v70
  %72 = vmatmul.f32.gmra.mxu0 %v51
  %v73 = vpop.f32.mrf.mxu0
  %v74 = vadd.f32 %v45, %v73
  %75 = vdwg.mxu0
  %v76 = vld [vmem:[%s1 + $0x90] sm:$0xff]
  %v77 = vld [vmem:[%s1 + $0x98] sm:$0xff]
  %v78 = vld [vmem:[%s1 + $0xa0] sm:$0xff]
  %v79 = vld [vmem:[%s1 + $0xa8] sm:$0xff]
  %v80 = vld [vmem:[%s1 + $0xb0] sm:$0xff]
  %v81 = vld [vmem:[%s1 + $0xb8] sm:$0xff]
  %v82 = vld [vmem:[%s1 + $0xc0] sm:$0xff]
  %v83 = vld [vmem:[%s1 + $0xc8] sm:$0xff]
  %v84 = vld [vmem:[%s1 + $0xd0] sm:$0xff]
  %v85 = vld [vmem:[%s1 + $0xd8] sm:$0xff]
  %v86 = vld [vmem:[%s1 + $0xe0] sm:$0xff]
  %v87 = vld [vmem:[%s1 + $0xf0] sm:$0xff]
  %v88 = vld [vmem:[%s1 + $0x100] sm:$0xff]
  %v89 = vld [vmem:[%s1 + $0x110] sm:$0xff]
  %v90 = vld [vmem:[%s1 + $0x120] sm:$0xff]
  %v91 = vld [vmem:[%s1 + $0x130] sm:$0xff]
  %v92 = vld [vmem:[%s1 + $0x140] sm:$0xff]
  %v93 = vld [vmem:[%s1 + $0x150] sm:$0xff]
  %v94 = vld [vmem:[%s1 + $0x160] sm:$0xff]
  %v95 = vld [vmem:[%s1 + $0x170] sm:$0xff]
  %v96 = vld [vmem:[%s1 + $0x180] sm:$0xff]
  %v97 = vld [vmem:[%s1 + $0x190] sm:$0xff]
  %v98 = vperm.slane %v76, 0
  %v99 = vperm.slane %v77, 0
  %vm100 = vcmask 261120
  %v102 = vsel %vm100, %v71, 0
  %v105 = vsel %vm100, %v74, 0
  %107 = vmatpush.msra.mxu0 0.0
  %108 = vmatpush.msra.mxu0 0.0
  %109 = vmatpush.msra.mxu0 0.0
  %110 = vmatpush.msra.mxu0 0.0
  %111 = vmatpush.msra.mxu0 0.0
  %112 = vmatpush.msra.mxu0 0.0
  %113 = vmatpush.msra.mxu0 0.0
  %114 = vmatpush.msra.mxu0 0.0
  %115 = vmatpush.msra.mxu0 0.0
  %116 = vmatpush.msra.mxu0 0.0
  %117 = vmatpush.msra.mxu0 0.0
  %118 = vmatpush.msra.mxu0 0.0
  %119 = vmatpush.msra.mxu0 %v84
  %120 = vmatpush.msra.mxu0 %v82
  %121 = vmatpush.msra.mxu0 %v80
  %122 = vmatpush.msra.mxu0 %v78
  %123 = vmatmul.f32.gmra.mxu0 %v102
  %v124 = vpop.f32.mrf.mxu0
  %v125 = vadd.f32 %v98, %v124
  %126 = vmatmul.f32.gmra.mxu0 %v105
  %v127 = vpop.f32.mrf.mxu0
  %v128 = vadd.f32 %v98, %v127
  %129 = vdwg.mxu0
  %130 = vmatpush.msra.mxu0 0.0
  %131 = vmatpush.msra.mxu0 0.0
  %132 = vmatpush.msra.mxu0 0.0
  %133 = vmatpush.msra.mxu0 0.0
  %134 = vmatpush.msra.mxu0 0.0
  %135 = vmatpush.msra.mxu0 0.0
  %136 = vmatpush.msra.mxu0 0.0
  %137 = vmatpush.msra.mxu0 0.0
  %138 = vmatpush.msra.mxu0 0.0
  %139 = vmatpush.msra.mxu0 0.0
  %140 = vmatpush.msra.mxu0 0.0
  %141 = vmatpush.msra.mxu0 0.0
  %142 = vmatpush.msra.mxu0 %v85
  %143 = vmatpush.msra.mxu0 %v83
  %144 = vmatpush.msra.mxu0 %v81
  %145 = vmatpush.msra.mxu0 %v79
  %146 = vmatmul.f32.gmra.mxu0 %v102
  %v147 = vpop.f32.mrf.mxu0
  %v148 = vadd.f32 %v99, %v147
  %149 = vmatmul.f32.gmra.mxu0 %v105
  %v150 = vpop.f32.mrf.mxu0
  %v151 = vadd.f32 %v99, %v150
  %152 = vdwg.mxu0
  %155 = vrot.lane.b32.xlu0 %v125, 96
  %v156 = vpop.permute.xlu0 %155
  %157 = vrot.lane.b32.xlu0 %v128, 96
  %v158 = vpop.permute.xlu0 %157
  %vm159 = vcmask 64512
  %v160 = vsel %vm159, %v125, 0
  %v162 = vsel %vm159, %v128, 0
  %v164 = vsel %vm159, %v156, 0
  %v166 = vsel %vm159, %v158, 0
  %168 = vmatpush.xpose.msra.mxu0 0.0
  %169 = vmatpush.xpose.msra.mxu0 0.0
  %170 = vmatpush.xpose.msra.mxu0 0.0
  %171 = vmatpush.xpose.msra.mxu0 0.0
  %172 = vmatpush.xpose.msra.mxu0 0.0
  %173 = vmatpush.xpose.msra.mxu0 0.0
  %174 = vmatpush.xpose.msra.mxu0 0.0
  %175 = vmatpush.xpose.msra.mxu0 0.0
  %176 = vmatpush.xpose.msra.mxu0 0.0
  %177 = vmatpush.xpose.msra.mxu0 0.0
  %178 = vmatpush.xpose.msra.mxu0 0.0
  %179 = vmatpush.xpose.msra.mxu0 0.0
  %180 = vmatpush.xpose.msra.mxu0 0.0
  %181 = vmatpush.xpose.msra.mxu0 0.0
  %182 = vmatpush.xpose.msra.mxu0 %v166
  %183 = vmatpush.xpose.msra.mxu0 %v164
  %184 = vmatmul.f32.gmra.mxu0 %v160
  %v185 = vpop.f32.mrf.mxu0
  %v186 = vadd.f32 0.0, %v185
  %187 = vmatmul.f32.gmra.mxu0 %v162
  %v188 = vpop.f32.mrf.mxu0
  %v189 = vadd.f32 0.0, %v188
  %190 = vdwg.mxu0
  %v191 = vmul.f32 %v186, 0.35355338
  %v192 = vmul.f32 %v189, 0.35355338
  %v193 = vadd.f32 %v191, %v21
  %v194 = vadd.f32 %v192, %v22
  %vm195 = vcmask 130048
  %v196 = vsel %vm195, %v193, -inf
  %197 = vmax.xlane.f32.xlu0 %v196
  %v198 = vpop.xlane.xlu0 %197
  %v199 = vsel %vm195, %v194, -inf
  %200 = vmax.xlane.f32.xlu0 %v199
  %v201 = vpop.xlane.xlu0 %200
  %v202 = vsub.f32 %v193, %v198
  %v203 = vsub.f32 %v194, %v201
  %v204 = vmul.f32 %v202, 1.442695
  %v205 = vpow.pop %v204
  %v206 = vmul.f32 %v203, 1.442695
  %v207 = vpow.pop %v206
  %v208 = vsel %vm195, %v205, 0.0
  %209 = vadd.xlane.f32.xlu0 %v208
  %v210 = vpop.xlane.xlu0 %209
  %v211 = vsel %vm195, %v207, 0.0
  %212 = vadd.xlane.f32.xlu0 %v211
  %v213 = vpop.xlane.xlu0 %212
  %v214 = vrcp.pop %v210
  %v215 = vrcp.pop %v213
  %v216 = vmul.f32 %v205, %v214
  %v217 = vmul.f32 %v207, %v215
  %218 = vrot.lane.b32.xlu0 %v125, 120
  %v219 = vpop.permute.xlu0 %218
  %220 = vrot.lane.b32.xlu0 %v128, 120
  %v221 = vpop.permute.xlu0 %220
  %222 = vrot.lane.b32.xlu0 %v125, 88
  %v223 = vpop.permute.xlu0 %222
  %224 = vrot.lane.b32.xlu0 %v128, 88
  %v225 = vpop.permute.xlu0 %224
  %v226 = vsel %vm159, %v219, 0
  %v228 = vsel %vm159, %v221, 0
  %v230 = vsel %vm159, %v223, 0
  %v232 = vsel %vm159, %v225, 0
  %234 = vmatpush.xpose.msra.mxu0 0.0
  %235 = vmatpush.xpose.msra.mxu0 0.0
  %236 = vmatpush.xpose.msra.mxu0 0.0
  %237 = vmatpush.xpose.msra.mxu0 0.0
  %238 = vmatpush.xpose.msra.mxu0 0.0
  %239 = vmatpush.xpose.msra.mxu0 0.0
  %240 = vmatpush.xpose.msra.mxu0 0.0
  %241 = vmatpush.xpose.msra.mxu0 0.0
  %242 = vmatpush.xpose.msra.mxu0 0.0
  %243 = vmatpush.xpose.msra.mxu0 0.0
  %244 = vmatpush.xpose.msra.mxu0 0.0
  %245 = vmatpush.xpose.msra.mxu0 0.0
  %246 = vmatpush.xpose.msra.mxu0 0.0
  %247 = vmatpush.xpose.msra.mxu0 0.0
  %248 = vmatpush.xpose.msra.mxu0 %v232
  %249 = vmatpush.xpose.msra.mxu0 %v230
  %250 = vmatmul.f32.gmra.mxu0 %v226
  %v251 = vpop.f32.mrf.mxu0
  %v252 = vadd.f32 0.0, %v251
  %253 = vmatmul.f32.gmra.mxu0 %v228
  %v254 = vpop.f32.mrf.mxu0
  %v255 = vadd.f32 0.0, %v254
  %256 = vdwg.mxu0
  %v257 = vmul.f32 %v252, 0.35355338
  %v258 = vmul.f32 %v255, 0.35355338
  %v259 = vadd.f32 %v257, %v21
  %v260 = vadd.f32 %v258, %v22
  %v261 = vsel %vm195, %v259, -inf
  %262 = vmax.xlane.f32.xlu0 %v261
  %v263 = vpop.xlane.xlu0 %262
  %v264 = vsel %vm195, %v260, -inf
  %265 = vmax.xlane.f32.xlu0 %v264
  %v266 = vpop.xlane.xlu0 %265
  %v267 = vsub.f32 %v259, %v263
  %v268 = vsub.f32 %v260, %v266
  %v269 = vmul.f32 %v267, 1.442695
  %v270 = vpow.pop %v269
  %v271 = vmul.f32 %v268, 1.442695
  %v272 = vpow.pop %v271
  %v273 = vsel %vm195, %v270, 0.0
  %274 = vadd.xlane.f32.xlu0 %v273
  %v275 = vpop.xlane.xlu0 %274
  %v276 = vsel %vm195, %v272, 0.0
  %277 = vadd.xlane.f32.xlu0 %v276
  %v278 = vpop.xlane.xlu0 %277
  %v279 = vrcp.pop %v275
  %v280 = vrcp.pop %v278
  %v281 = vmul.f32 %v270, %v279
  %v282 = vmul.f32 %v272, %v280
  %283 = vrot.lane.b32.xlu0 %v125, 32
  %v284 = vpop.permute.xlu0 %283
  %285 = vrot.lane.b32.xlu0 %v128, 32
  %v286 = vpop.permute.xlu0 %285
  %v290 = vsel %vm195, %v281, 0
  %v293 = vsel %vm195, %v282, 0
  %295 = vmatpush.msra.mxu0 0.0
  %296 = vmatpush.msra.mxu0 0.0
  %297 = vmatpush.msra.mxu0 0.0
  %298 = vmatpush.msra.mxu0 0.0
  %299 = vmatpush.msra.mxu0 0.0
  %300 = vmatpush.msra.mxu0 0.0
  %301 = vmatpush.msra.mxu0 0.0
  %302 = vmatpush.msra.mxu0 0.0
  %303 = vmatpush.msra.mxu0 0.0
  %304 = vmatpush.msra.mxu0 0.0
  %305 = vmatpush.msra.mxu0 0.0
  %306 = vmatpush.msra.mxu0 0.0
  %307 = vmatpush.msra.mxu0 0.0
  %308 = vmatpush.msra.mxu0 0.0
  %309 = vmatpush.msra.mxu0 %v286
  %310 = vmatpush.msra.mxu0 %v284
  %311 = vmatmul.f32.gmra.mxu0 %v290
  %v312 = vpop.f32.mrf.mxu0
  %v313 = vadd.f32 0.0, %v312
  %314 = vmatmul.f32.gmra.mxu0 %v293
  %v315 = vpop.f32.mrf.mxu0
  %v316 = vadd.f32 0.0, %v315
  %317 = vdwg.mxu0
  %318 = vrot.lane.b32.xlu0 %v125, 64
  %v319 = vpop.permute.xlu0 %318
  %320 = vrot.lane.b32.xlu0 %v128, 64
  %v321 = vpop.permute.xlu0 %320
  %v325 = vsel %vm195, %v216, 0
  %v328 = vsel %vm195, %v217, 0
  %330 = vmatpush.msra.mxu0 0.0
  %331 = vmatpush.msra.mxu0 0.0
  %332 = vmatpush.msra.mxu0 0.0
  %333 = vmatpush.msra.mxu0 0.0
  %334 = vmatpush.msra.mxu0 0.0
  %335 = vmatpush.msra.mxu0 0.0
  %336 = vmatpush.msra.mxu0 0.0
  %337 = vmatpush.msra.mxu0 0.0
  %338 = vmatpush.msra.mxu0 0.0
  %339 = vmatpush.msra.mxu0 0.0
  %340 = vmatpush.msra.mxu0 0.0
  %341 = vmatpush.msra.mxu0 0.0
  %342 = vmatpush.msra.mxu0 0.0
  %343 = vmatpush.msra.mxu0 0.0
  %344 = vmatpush.msra.mxu0 %v321
  %345 = vmatpush.msra.mxu0 %v319
  %346 = vmatmul.f32.gmra.mxu0 %v325
  %v347 = vpop.f32.mrf.mxu0
  %v348 = vadd.f32 %v313, %v347
  %349 = vmatmul.f32.gmra.mxu0 %v328
  %v350 = vpop.f32.mrf.mxu0
  %v351 = vadd.f32 %v316, %v350
  %352 = vdwg.mxu0
  %353 = vrot.lane.b32.xlu0 %v125, 112
  %v354 = vpop.permute.xlu0 %353
  %355 = vrot.lane.b32.xlu0 %v128, 112
  %v356 = vpop.permute.xlu0 %355
  %357 = vrot.lane.b32.xlu0 %v125, 80
  %v358 = vpop.permute.xlu0 %357
  %359 = vrot.lane.b32.xlu0 %v128, 80
  %v360 = vpop.permute.xlu0 %359
  %v361 = vsel %vm159, %v354, 0
  %v363 = vsel %vm159, %v356, 0
  %v365 = vsel %vm159, %v358, 0
  %v367 = vsel %vm159, %v360, 0
  %369 = vmatpush.xpose.msra.mxu0 0.0
  %370 = vmatpush.xpose.msra.mxu0 0.0
  %371 = vmatpush.xpose.msra.mxu0 0.0
  %372 = vmatpush.xpose.msra.mxu0 0.0
  %373 = vmatpush.xpose.msra.mxu0 0.0
  %374 = vmatpush.xpose.msra.mxu0 0.0
  %375 = vmatpush.xpose.msra.mxu0 0.0
  %376 = vmatpush.xpose.msra.mxu0 0.0
  %377 = vmatpush.xpose.msra.mxu0 0.0
  %378 = vmatpush.xpose.msra.mxu0 0.0
  %379 = vmatpush.xpose.msra.mxu0 0.0
  %380 = vmatpush.xpose.msra.mxu0 0.0
  %381 = vmatpush.xpose.msra.mxu0 0.0
  %382 = vmatpush.xpose.msra.mxu0 0.0
  %383 = vmatpush.xpose.msra.mxu0 %v367
  %384 = vmatpush.xpose.msra.mxu0 %v365
  %385 = vmatmul.f32.gmra.mxu0 %v361
  %v386 = vpop.f32.mrf.mxu0
  %v387 = vadd.f32 0.0, %v386
  %388 = vmatmul.f32.gmra.mxu0 %v363
  %v389 = vpop.f32.mrf.mxu0
  %v390 = vadd.f32 0.0, %v389
  %391 = vdwg.mxu0
  %v392 = vmul.f32 %v387, 0.35355338
  %v393 = vmul.f32 %v390, 0.35355338
  %v394 = vadd.f32 %v392, %v21
  %v395 = vadd.f32 %v393, %v22
  %v396 = vsel %vm195, %v394, -inf
  %397 = vmax.xlane.f32.xlu0 %v396
  %v398 = vpop.xlane.xlu0 %397
  %v399 = vsel %vm195, %v395, -inf
  %400 = vmax.xlane.f32.xlu0 %v399
  %v401 = vpop.xlane.xlu0 %400
  %v402 = vsub.f32 %v394, %v398
  %v403 = vsub.f32 %v395, %v401
  %v404 = vmul.f32 %v402, 1.442695
  %v405 = vpow.pop %v404
  %v406 = vmul.f32 %v403, 1.442695
  %v407 = vpow.pop %v406
  %v408 = vsel %vm195, %v405, 0.0
  %409 = vadd.xlane.f32.xlu0 %v408
  %v410 = vpop.xlane.xlu0 %409
  %v411 = vsel %vm195, %v407, 0.0
  %412 = vadd.xlane.f32.xlu0 %v411
  %v413 = vpop.xlane.xlu0 %412
  %v414 = vrcp.pop %v410
  %v415 = vrcp.pop %v413
  %v416 = vmul.f32 %v405, %v414
  %v417 = vmul.f32 %v407, %v415
  %v419 = vsel %vm195, %v416, 0
  %v422 = vsel %vm195, %v417, 0
  %424 = vmatpush.msra.mxu0 0.0
  %425 = vmatpush.msra.mxu0 0.0
  %426 = vmatpush.msra.mxu0 0.0
  %427 = vmatpush.msra.mxu0 0.0
  %428 = vmatpush.msra.mxu0 0.0
  %429 = vmatpush.msra.mxu0 0.0
  %430 = vmatpush.msra.mxu0 0.0
  %431 = vmatpush.msra.mxu0 0.0
  %432 = vmatpush.msra.mxu0 0.0
  %433 = vmatpush.msra.mxu0 0.0
  %434 = vmatpush.msra.mxu0 0.0
  %435 = vmatpush.msra.mxu0 0.0
  %436 = vmatpush.msra.mxu0 0.0
  %437 = vmatpush.msra.mxu0 0.0
  %438 = vmatpush.msra.mxu0 %v151
  %439 = vmatpush.msra.mxu0 %v148
  %440 = vmatmul.f32.gmra.mxu0 %v419
  %v441 = vpop.f32.mrf.mxu0
  %v442 = vadd.f32 0.0, %v441
  %443 = vmatmul.f32.gmra.mxu0 %v422
  %v444 = vpop.f32.mrf.mxu0
  %v445 = vadd.f32 0.0, %v444
  %446 = vdwg.mxu0
  %v447 = vadd.f32 %v348, %v442
  %v448 = vadd.f32 %v351, %v445
  %449 = vrot.lane.b32.xlu0 %v125, 104
  %v450 = vpop.permute.xlu0 %449
  %451 = vrot.lane.b32.xlu0 %v128, 104
  %v452 = vpop.permute.xlu0 %451
  %453 = vrot.lane.b32.xlu0 %v125, 72
  %v454 = vpop.permute.xlu0 %453
  %455 = vrot.lane.b32.xlu0 %v128, 72
  %v456 = vpop.permute.xlu0 %455
  %v457 = vsel %vm159, %v450, 0
  %v459 = vsel %vm159, %v452, 0
  %v461 = vsel %vm159, %v454, 0
  %v463 = vsel %vm159, %v456, 0
  %465 = vmatpush.xpose.msra.mxu0 0.0
  %466 = vmatpush.xpose.msra.mxu0 0.0
  %467 = vmatpush.xpose.msra.mxu0 0.0
  %468 = vmatpush.xpose.msra.mxu0 0.0
  %469 = vmatpush.xpose.msra.mxu0 0.0
  %470 = vmatpush.xpose.msra.mxu0 0.0
  %471 = vmatpush.xpose.msra.mxu0 0.0
  %472 = vmatpush.xpose.msra.mxu0 0.0
  %473 = vmatpush.xpose.msra.mxu0 0.0
  %474 = vmatpush.xpose.msra.mxu0 0.0
  %475 = vmatpush.xpose.msra.mxu0 0.0
  %476 = vmatpush.xpose.msra.mxu0 0.0
  %477 = vmatpush.xpose.msra.mxu0 0.0
  %478 = vmatpush.xpose.msra.mxu0 0.0
  %479 = vmatpush.xpose.msra.mxu0 %v463
  %480 = vmatpush.xpose.msra.mxu0 %v461
  %481 = vmatmul.f32.gmra.mxu0 %v457
  %v482 = vpop.f32.mrf.mxu0
  %v483 = vadd.f32 0.0, %v482
  %484 = vmatmul.f32.gmra.mxu0 %v459
  %v485 = vpop.f32.mrf.mxu0
  %v486 = vadd.f32 0.0, %v485
  %487 = vdwg.mxu0
  %v488 = vmul.f32 %v483, 0.35355338
  %v489 = vmul.f32 %v486, 0.35355338
  %v490 = vadd.f32 %v488, %v21
  %v491 = vadd.f32 %v489, %v22
  %v492 = vsel %vm195, %v490, -inf
  %493 = vmax.xlane.f32.xlu0 %v492
  %v494 = vpop.xlane.xlu0 %493
  %v495 = vsel %vm195, %v491, -inf
  %496 = vmax.xlane.f32.xlu0 %v495
  %v497 = vpop.xlane.xlu0 %496
  %v498 = vsub.f32 %v490, %v494
  %v499 = vsub.f32 %v491, %v497
  %v500 = vmul.f32 %v498, 1.442695
  %v501 = vpow.pop %v500
  %v502 = vmul.f32 %v499, 1.442695
  %v503 = vpow.pop %v502
  %v504 = vsel %vm195, %v501, 0.0
  %505 = vadd.xlane.f32.xlu0 %v504
  %v506 = vpop.xlane.xlu0 %505
  %v507 = vsel %vm195, %v503, 0.0
  %508 = vadd.xlane.f32.xlu0 %v507
  %v509 = vpop.xlane.xlu0 %508
  %v510 = vrcp.pop %v506
  %v511 = vrcp.pop %v509
  %v512 = vmul.f32 %v501, %v510
  %v513 = vmul.f32 %v503, %v511
  %516 = vrot.lane.b32.xlu0 %v148, 96
  %v517 = vpop.permute.xlu0 %516
  %518 = vrot.lane.b32.xlu0 %v151, 96
  %v519 = vpop.permute.xlu0 %518
  %v523 = vsel %vm195, %v512, 0
  %v526 = vsel %vm195, %v513, 0
  %528 = vmatpush.msra.mxu0 0.0
  %529 = vmatpush.msra.mxu0 0.0
  %530 = vmatpush.msra.mxu0 0.0
  %531 = vmatpush.msra.mxu0 0.0
  %532 = vmatpush.msra.mxu0 0.0
  %533 = vmatpush.msra.mxu0 0.0
  %534 = vmatpush.msra.mxu0 0.0
  %535 = vmatpush.msra.mxu0 0.0
  %536 = vmatpush.msra.mxu0 0.0
  %537 = vmatpush.msra.mxu0 0.0
  %538 = vmatpush.msra.mxu0 0.0
  %539 = vmatpush.msra.mxu0 0.0
  %540 = vmatpush.msra.mxu0 0.0
  %541 = vmatpush.msra.mxu0 0.0
  %542 = vmatpush.msra.mxu0 %v519
  %543 = vmatpush.msra.mxu0 %v517
  %544 = vmatmul.f32.gmra.mxu0 %v523
  %v545 = vpop.f32.mrf.mxu0
  %v546 = vadd.f32 0.0, %v545
  %547 = vmatmul.f32.gmra.mxu0 %v526
  %v548 = vpop.f32.mrf.mxu0
  %v549 = vadd.f32 0.0, %v548
  %550 = vdwg.mxu0
  %v551 = vadd.f32 %v447, %v546
  %v552 = vadd.f32 %v448, %v549
  %v553 = vperm.slane %v76, 1
  %v554 = vadd.f32 %v551, %v553
  %v555 = vadd.f32 %v552, %v553
  %v556 = vadd.f32 %v71, %v554
  %v557 = vadd.f32 %v74, %v555
  %v558 = vsel %vm100, %v556, 0.0
  %559 = vadd.xlane.f32.xlu0 %v558
  %v560 = vpop.xlane.xlu0 %559
  %v561 = vsel %vm100, %v557, 0.0
  %562 = vadd.xlane.f32.xlu0 %v561
  %v563 = vpop.xlane.xlu0 %562
  %v564 = vrcp.pop 32.0
  %v565 = vmul.f32 32.0, %v564
  %v566 = vsub.f32 1.0, %v565
  %v567 = vmul.f32 %v564, %v566
  %v568 = vadd.f32 %v564, %v567
  %vm569 = vweird.f32 %v564
  %v570 = vsel %vm569, %v564, %v568
  %v571 = vmul.f32 %v560, %v570
  %v572 = vmul.f32 %v563, %v570
  %v573 = vsub.f32 %v556, %v571
  %v574 = vsub.f32 %v557, %v572
  %v575 = vmul.f32 %v573, %v573
  %v576 = vmul.f32 %v574, %v574
  %v577 = vsel %vm100, %v575, 0.0
  %578 = vadd.xlane.f32.xlu0 %v577
  %v579 = vpop.xlane.xlu0 %578
  %v580 = vsel %vm100, %v576, 0.0
  %581 = vadd.xlane.f32.xlu0 %v580
  %v582 = vpop.xlane.xlu0 %581
  %v583 = vmul.f32 %v579, %v570
  %v584 = vmul.f32 %v582, %v570
  %v585 = vadd.f32 %v583, 1e-05
  %v586 = vadd.f32 %v584, 1e-05
  %v587 = vrsqrt.pop %v585
  %v588 = vmul.f32 %v587, %v585
  %v589 = vmul.f32 %v588, %v587
  %v590 = vmul.f32 0.5, %v589
  %v591 = vsub.f32 1.5, %v590
  %v592 = vmul.f32 %v587, %v591
  %vm593 = vweird.f32 %v585
  %vm594 = vweird.f32 %v587
  %vm595 = vmor %vm593, %vm594
  %v596 = vsel %vm595, %v587, %v592
  %v597 = vrsqrt.pop %v586
  %v598 = vmul.f32 %v597, %v586
  %v599 = vmul.f32 %v598, %v597
  %v600 = vmul.f32 0.5, %v599
  %v601 = vsub.f32 1.5, %v600
  %v602 = vmul.f32 %v597, %v601
  %vm603 = vweird.f32 %v586
  %vm604 = vweird.f32 %v597
  %vm605 = vmor %vm603, %vm604
  %v606 = vsel %vm605, %v597, %v602
  %v607 = vmul.f32 %v573, %v596
  %v608 = vmul.f32 %v574, %v606
  %v609 = vperm.slane %v76, 2
  %v610 = vmul.f32 %v607, %v609
  %v611 = vmul.f32 %v608, %v609
  %v612 = vperm.slane %v76, 3
  %v613 = vadd.f32 %v610, %v612
  %v614 = vadd.f32 %v611, %v612
  %v615 = vperm.slane %v76, 4
  %v617 = vsel %vm100, %v613, 0
  %v620 = vsel %vm100, %v614, 0
  %622 = vmatpush.msra.mxu0 0.0
  %623 = vmatpush.msra.mxu0 0.0
  %624 = vmatpush.msra.mxu0 0.0
  %625 = vmatpush.msra.mxu0 0.0
  %626 = vmatpush.msra.mxu0 0.0
  %627 = vmatpush.msra.mxu0 0.0
  %628 = vmatpush.msra.mxu0 0.0
  %629 = vmatpush.msra.mxu0 0.0
  %630 = vmatpush.msra.mxu0 0.0
  %631 = vmatpush.msra.mxu0 0.0
  %632 = vmatpush.msra.mxu0 0.0
  %633 = vmatpush.msra.mxu0 0.0
  %634 = vmatpush.msra.mxu0 %v89
  %635 = vmatpush.msra.mxu0 %v88
  %636 = vmatpush.msra.mxu0 %v87
  %637 = vmatpush.msra.mxu0 %v86
  %638 = vmatmul.f32.gmra.mxu0 %v617
  %v639 = vpop.f32.mrf.mxu0
  %v640 = vadd.f32 %v615, %v639
  %641 = vmatmul.f32.gmra.mxu0 %v620
  %v642 = vpop.f32.mrf.mxu0
  %v643 = vadd.f32 %v615, %v642
  %644 = vdwg.mxu0
  %v645 = vmax.f32 %v640, 0.0
  %v646 = vmax.f32 %v643, 0.0
  %v647 = vperm.slane %v76, 5
  %v649 = vsel %vm46, %v645, 0
  %v652 = vsel %vm46, %v646, 0
  %654 = vmatpush.msra.mxu0 0.0
  %655 = vmatpush.msra.mxu0 0.0
  %656 = vmatpush.msra.mxu0 0.0
  %657 = vmatpush.msra.mxu0 0.0
  %658 = vmatpush.msra.mxu0 0.0
  %659 = vmatpush.msra.mxu0 0.0
  %660 = vmatpush.msra.mxu0 0.0
  %661 = vmatpush.msra.mxu0 0.0
  %662 = vmatpush.msra.mxu0 %v97
  %663 = vmatpush.msra.mxu0 %v96
  %664 = vmatpush.msra.mxu0 %v95
  %665 = vmatpush.msra.mxu0 %v94
  %666 = vmatpush.msra.mxu0 %v93
  %667 = vmatpush.msra.mxu0 %v92
  %668 = vmatpush.msra.mxu0 %v91
  %669 = vmatpush.msra.mxu0 %v90
  %670 = vmatmul.f32.gmra.mxu0 %v649
  %v671 = vpop.f32.mrf.mxu0
  %v672 = vadd.f32 %v647, %v671
  %673 = vmatmul.f32.gmra.mxu0 %v652
  %v674 = vpop.f32.mrf.mxu0
  %v675 = vadd.f32 %v647, %v674
  %676 = vdwg.mxu0
  %v677 = vadd.f32 %v613, %v672
  %v678 = vadd.f32 %v614, %v675
  %v679 = vsel %vm100, %v677, 0.0
  %680 = vadd.xlane.f32.xlu0 %v679
  %v681 = vpop.xlane.xlu0 %680
  %v682 = vsel %vm100, %v678, 0.0
  %683 = vadd.xlane.f32.xlu0 %v682
  %v684 = vpop.xlane.xlu0 %683
  %v685 = vmul.f32 %v681, %v570
  %v686 = vmul.f32 %v684, %v570
  %v687 = vsub.f32 %v677, %v685
  %v688 = vsub.f32 %v678, %v686
  %v689 = vmul.f32 %v687, %v687
  %v690 = vmul.f32 %v688, %v688
  %v691 = vsel %vm100, %v689, 0.0
  %692 = vadd.xlane.f32.xlu0 %v691
  %v693 = vpop.xlane.xlu0 %692
  %v694 = vsel %vm100, %v690, 0.0
  %695 = vadd.xlane.f32.xlu0 %v694
  %v696 = vpop.xlane.xlu0 %695
  %v697 = vmul.f32 %v693, %v570
  %v698 = vmul.f32 %v696, %v570
  %v699 = vadd.f32 %v697, 1e-05
  %v700 = vadd.f32 %v698, 1e-05
  %v701 = vrsqrt.pop %v699
  %v702 = vmul.f32 %v701, %v699
  %v703 = vmul.f32 %v702, %v701
  %v704 = vmul.f32 0.5, %v703
  %v705 = vsub.f32 1.5, %v704
  %v706 = vmul.f32 %v701, %v705
  %vm707 = vweird.f32 %v699
  %vm708 = vweird.f32 %v701
  %vm709 = vmor %vm707, %vm708
  %v710 = vsel %vm709, %v701, %v706
  %v711 = vrsqrt.pop %v700
  %v712 = vmul.f32 %v711, %v700
  %v713 = vmul.f32 %v712, %v711
  %v714 = vmul.f32 0.5, %v713
  %v715 = vsub.f32 1.5, %v714
  %v716 = vmul.f32 %v711, %v715
  %vm717 = vweird.f32 %v700
  %vm718 = vweird.f32 %v711
  %vm719 = vmor %vm717, %vm718
  %v720 = vsel %vm719, %v711, %v716
  %v721 = vmul.f32 %v687, %v710
  %v722 = vmul.f32 %v688, %v720
  %v723 = vperm.slane %v76, 6
  %v724 = vmul.f32 %v721, %v723
  %v725 = vmul.f32 %v722, %v723
  %v726 = vperm.slane %v76, 7
  %v727 = vadd.f32 %v724, %v726
  %v728 = vadd.f32 %v725, %v726
  %v729 = vld [vmem:[%s1 + $0x1a0] sm:$0xff]
  %v730 = vld [vmem:[%s1 + $0x1a8] sm:$0xff]
  %v731 = vld [vmem:[%s1 + $0x1b0] sm:$0xff]
  %v732 = vld [vmem:[%s1 + $0x1b8] sm:$0xff]
  %v733 = vld [vmem:[%s1 + $0x1c0] sm:$0xff]
  %v734 = vld [vmem:[%s1 + $0x1c8] sm:$0xff]
  %v735 = vld [vmem:[%s1 + $0x1d0] sm:$0xff]
  %v736 = vld [vmem:[%s1 + $0x1d8] sm:$0xff]
  %v737 = vld [vmem:[%s1 + $0x1e0] sm:$0xff]
  %v738 = vld [vmem:[%s1 + $0x1e8] sm:$0xff]
  %v739 = vld [vmem:[%s1 + $0x1f0] sm:$0xff]
  %v740 = vld [vmem:[%s1 + $0x200] sm:$0xff]
  %v741 = vld [vmem:[%s1 + $0x210] sm:$0xff]
  %v742 = vld [vmem:[%s1 + $0x220] sm:$0xff]
  %v743 = vld [vmem:[%s1 + $0x230] sm:$0xff]
  %v744 = vld [vmem:[%s1 + $0x240] sm:$0xff]
  %v745 = vld [vmem:[%s1 + $0x250] sm:$0xff]
  %v746 = vld [vmem:[%s1 + $0x260] sm:$0xff]
  %v747 = vld [vmem:[%s1 + $0x270] sm:$0xff]
  %v748 = vld [vmem:[%s1 + $0x280] sm:$0xff]
  %v749 = vld [vmem:[%s1 + $0x290] sm:$0xff]
  %v750 = vld [vmem:[%s1 + $0x2a0] sm:$0xff]
  %v751 = vperm.slane %v729, 0
  %v752 = vperm.slane %v730, 0
  %v754 = vsel %vm100, %v727, 0
  %v757 = vsel %vm100, %v728, 0
  %759 = vmatpush.msra.mxu0 0.0
  %760 = vmatpush.msra.mxu0 0.0
  %761 = vmatpush.msra.mxu0 0.0
  %762 = vmatpush.msra.mxu0 0.0
  %763 = vmatpush.msra.mxu0 0.0
  %764 = vmatpush.msra.mxu0 0.0
  %765 = vmatpush.msra.mxu0 0.0
  %766 = vmatpush.msra.mxu0 0.0
  %767 = vmatpush.msra.mxu0 0.0
  %768 = vmatpush.msra.mxu0 0.0
  %769 = vmatpush.msra.mxu0 0.0
  %770 = vmatpush.msra.mxu0 0.0
  %771 = vmatpush.msra.mxu0 %v737
  %772 = vmatpush.msra.mxu0 %v735
  %773 = vmatpush.msra.mxu0 %v733
  %774 = vmatpush.msra.mxu0 %v731
  %775 = vmatmul.f32.gmra.mxu0 %v754
  %v776 = vpop.f32.mrf.mxu0
  %v777 = vadd.f32 %v751, %v776
  %778 = vmatmul.f32.gmra.mxu0 %v757
  %v779 = vpop.f32.mrf.mxu0
  %v780 = vadd.f32 %v751, %v779
  %781 = vdwg.mxu0
  %782 = vmatpush.msra.mxu0 0.0
  %783 = vmatpush.msra.mxu0 0.0
  %784 = vmatpush.msra.mxu0 0.0
  %785 = vmatpush.msra.mxu0 0.0
  %786 = vmatpush.msra.mxu0 0.0
  %787 = vmatpush.msra.mxu0 0.0
  %788 = vmatpush.msra.mxu0 0.0
  %789 = vmatpush.msra.mxu0 0.0
  %790 = vmatpush.msra.mxu0 0.0
  %791 = vmatpush.msra.mxu0 0.0
  %792 = vmatpush.msra.mxu0 0.0
  %793 = vmatpush.msra.mxu0 0.0
  %794 = vmatpush.msra.mxu0 %v738
  %795 = vmatpush.msra.mxu0 %v736
  %796 = vmatpush.msra.mxu0 %v734
  %797 = vmatpush.msra.mxu0 %v732
  %798 = vmatmul.f32.gmra.mxu0 %v754
  %v799 = vpop.f32.mrf.mxu0
  %v800 = vadd.f32 %v752, %v799
  %801 = vmatmul.f32.gmra.mxu0 %v757
  %v802 = vpop.f32.mrf.mxu0
  %v803 = vadd.f32 %v752, %v802
  %804 = vdwg.mxu0
  %807 = vrot.lane.b32.xlu0 %v777, 96
  %v808 = vpop.permute.xlu0 %807
  %809 = vrot.lane.b32.xlu0 %v780, 96
  %v810 = vpop.permute.xlu0 %809
  %v811 = vsel %vm159, %v777, 0
  %v813 = vsel %vm159, %v780, 0
  %v815 = vsel %vm159, %v808, 0
  %v817 = vsel %vm159, %v810, 0
  %819 = vmatpush.xpose.msra.mxu0 0.0
  %820 = vmatpush.xpose.msra.mxu0 0.0
  %821 = vmatpush.xpose.msra.mxu0 0.0
  %822 = vmatpush.xpose.msra.mxu0 0.0
  %823 = vmatpush.xpose.msra.mxu0 0.0
  %824 = vmatpush.xpose.msra.mxu0 0.0
  %825 = vmatpush.xpose.msra.mxu0 0.0
  %826 = vmatpush.xpose.msra.mxu0 0.0
  %827 = vmatpush.xpose.msra.mxu0 0.0
  %828 = vmatpush.xpose.msra.mxu0 0.0
  %829 = vmatpush.xpose.msra.mxu0 0.0
  %830 = vmatpush.xpose.msra.mxu0 0.0
  %831 = vmatpush.xpose.msra.mxu0 0.0
  %832 = vmatpush.xpose.msra.mxu0 0.0
  %833 = vmatpush.xpose.msra.mxu0 %v817
  %834 = vmatpush.xpose.msra.mxu0 %v815
  %835 = vmatmul.f32.gmra.mxu0 %v811
  %v836 = vpop.f32.mrf.mxu0
  %v837 = vadd.f32 0.0, %v836
  %838 = vmatmul.f32.gmra.mxu0 %v813
  %v839 = vpop.f32.mrf.mxu0
  %v840 = vadd.f32 0.0, %v839
  %841 = vdwg.mxu0
  %v842 = vmul.f32 %v837, 0.35355338
  %v843 = vmul.f32 %v840, 0.35355338
  %v844 = vadd.f32 %v842, %v21
  %v845 = vadd.f32 %v843, %v22
  %v846 = vsel %vm195, %v844, -inf
  %847 = vmax.xlane.f32.xlu0 %v846
  %v848 = vpop.xlane.xlu0 %847
  %v849 = vsel %vm195, %v845, -inf
  %850 = vmax.xlane.f32.xlu0 %v849
  %v851 = vpop.xlane.xlu0 %850
  %v852 = vsub.f32 %v844, %v848
  %v853 = vsub.f32 %v845, %v851
  %v854 = vmul.f32 %v852, 1.442695
  %v855 = vpow.pop %v854
  %v856 = vmul.f32 %v853, 1.442695
  %v857 = vpow.pop %v856
  %v858 = vsel %vm195, %v855, 0.0
  %859 = vadd.xlane.f32.xlu0 %v858
  %v860 = vpop.xlane.xlu0 %859
  %v861 = vsel %vm195, %v857, 0.0
  %862 = vadd.xlane.f32.xlu0 %v861
  %v863 = vpop.xlane.xlu0 %862
  %v864 = vrcp.pop %v860
  %v865 = vrcp.pop %v863
  %v866 = vmul.f32 %v855, %v864
  %v867 = vmul.f32 %v857, %v865
  %868 = vrot.lane.b32.xlu0 %v777, 120
  %v869 = vpop.permute.xlu0 %868
  %870 = vrot.lane.b32.xlu0 %v780, 120
  %v871 = vpop.permute.xlu0 %870
  %872 = vrot.lane.b32.xlu0 %v777, 88
  %v873 = vpop.permute.xlu0 %872
  %874 = vrot.lane.b32.xlu0 %v780, 88
  %v875 = vpop.permute.xlu0 %874
  %v876 = vsel %vm159, %v869, 0
  %v878 = vsel %vm159, %v871, 0
  %v880 = vsel %vm159, %v873, 0
  %v882 = vsel %vm159, %v875, 0
  %884 = vmatpush.xpose.msra.mxu0 0.0
  %885 = vmatpush.xpose.msra.mxu0 0.0
  %886 = vmatpush.xpose.msra.mxu0 0.0
  %887 = vmatpush.xpose.msra.mxu0 0.0
  %888 = vmatpush.xpose.msra.mxu0 0.0
  %889 = vmatpush.xpose.msra.mxu0 0.0
  %890 = vmatpush.xpose.msra.mxu0 0.0
  %891 = vmatpush.xpose.msra.mxu0 0.0
  %892 = vmatpush.xpose.msra.mxu0 0.0
  %893 = vmatpush.xpose.msra.mxu0 0.0
  %894 = vmatpush.xpose.msra.mxu0 0.0
  %895 = vmatpush.xpose.msra.mxu0 0.0
  %896 = vmatpush.xpose.msra.mxu0 0.0
  %897 = vmatpush.xpose.msra.mxu0 0.0
  %898 = vmatpush.xpose.msra.mxu0 %v882
  %899 = vmatpush.xpose.msra.mxu0 %v880
  %900 = vmatmul.f32.gmra.mxu0 %v876
  %v901 = vpop.f32.mrf.mxu0
  %v902 = vadd.f32 0.0, %v901
  %903 = vmatmul.f32.gmra.mxu0 %v878
  %v904 = vpop.f32.mrf.mxu0
  %v905 = vadd.f32 0.0, %v904
  %906 = vdwg.mxu0
  %v907 = vmul.f32 %v902, 0.35355338
  %v908 = vmul.f32 %v905, 0.35355338
  %v909 = vadd.f32 %v907, %v21
  %v910 = vadd.f32 %v908, %v22
  %v911 = vsel %vm195, %v909, -inf
  %912 = vmax.xlane.f32.xlu0 %v911
  %v913 = vpop.xlane.xlu0 %912
  %v914 = vsel %vm195, %v910, -inf
  %915 = vmax.xlane.f32.xlu0 %v914
  %v916 = vpop.xlane.xlu0 %915
  %v917 = vsub.f32 %v909, %v913
  %v918 = vsub.f32 %v910, %v916
  %v919 = vmul.f32 %v917, 1.442695
  %v920 = vpow.pop %v919
  %v921 = vmul.f32 %v918, 1.442695
  %v922 = vpow.pop %v921
  %v923 = vsel %vm195, %v920, 0.0
  %924 = vadd.xlane.f32.xlu0 %v923
  %v925 = vpop.xlane.xlu0 %924
  %v926 = vsel %vm195, %v922, 0.0
  %927 = vadd.xlane.f32.xlu0 %v926
  %v928 = vpop.xlane.xlu0 %927
  %v929 = vrcp.pop %v925
  %v930 = vrcp.pop %v928
  %v931 = vmul.f32 %v920, %v929
  %v932 = vmul.f32 %v922, %v930
  %933 = vrot.lane.b32.xlu0 %v777, 32
  %v934 = vpop.permute.xlu0 %933
  %935 = vrot.lane.b32.xlu0 %v780, 32
  %v936 = vpop.permute.xlu0 %935
  %v940 = vsel %vm195, %v931, 0
  %v943 = vsel %vm195, %v932, 0
  %945 = vmatpush.msra.mxu0 0.0
  %946 = vmatpush.msra.mxu0 0.0
  %947 = vmatpush.msra.mxu0 0.0
  %948 = vmatpush.msra.mxu0 0.0
  %949 = vmatpush.msra.mxu0 0.0
  %950 = vmatpush.msra.mxu0 0.0
  %951 = vmatpush.msra.mxu0 0.0
  %952 = vmatpush.msra.mxu0 0.0
  %953 = vmatpush.msra.mxu0 0.0
  %954 = vmatpush.msra.mxu0 0.0
  %955 = vmatpush.msra.mxu0 0.0
  %956 = vmatpush.msra.mxu0 0.0
  %957 = vmatpush.msra.mxu0 0.0
  %958 = vmatpush.msra.mxu0 0.0
  %959 = vmatpush.msra.mxu0 %v936
  %960 = vmatpush.msra.mxu0 %v934
  %961 = vmatmul.f32.gmra.mxu0 %v940
  %v962 = vpop.f32.mrf.mxu0
  %v963 = vadd.f32 0.0, %v962
  %964 = vmatmul.f32.gmra.mxu0 %v943
  %v965 = vpop.f32.mrf.mxu0
  %v966 = vadd.f32 0.0, %v965
  %967 = vdwg.mxu0
  %968 = vrot.lane.b32.xlu0 %v777, 64
  %v969 = vpop.permute.xlu0 %968
  %970 = vrot.lane.b32.xlu0 %v780, 64
  %v971 = vpop.permute.xlu0 %970
  %v975 = vsel %vm195, %v866, 0
  %v978 = vsel %vm195, %v867, 0
  %980 = vmatpush.msra.mxu0 0.0
  %981 = vmatpush.msra.mxu0 0.0
  %982 = vmatpush.msra.mxu0 0.0
  %983 = vmatpush.msra.mxu0 0.0
  %984 = vmatpush.msra.mxu0 0.0
  %985 = vmatpush.msra.mxu0 0.0
  %986 = vmatpush.msra.mxu0 0.0
  %987 = vmatpush.msra.mxu0 0.0
  %988 = vmatpush.msra.mxu0 0.0
  %989 = vmatpush.msra.mxu0 0.0
  %990 = vmatpush.msra.mxu0 0.0
  %991 = vmatpush.msra.mxu0 0.0
  %992 = vmatpush.msra.mxu0 0.0
  %993 = vmatpush.msra.mxu0 0.0
  %994 = vmatpush.msra.mxu0 %v971
  %995 = vmatpush.msra.mxu0 %v969
  %996 = vmatmul.f32.gmra.mxu0 %v975
  %v997 = vpop.f32.mrf.mxu0
  %v998 = vadd.f32 %v963, %v997
  %999 = vmatmul.f32.gmra.mxu0 %v978
  %v1000 = vpop.f32.mrf.mxu0
  %v1001 = vadd.f32 %v966, %v1000
  %1002 = vdwg.mxu0
  %1003 = vrot.lane.b32.xlu0 %v777, 112
  %v1004 = vpop.permute.xlu0 %1003
  %1005 = vrot.lane.b32.xlu0 %v780, 112
  %v1006 = vpop.permute.xlu0 %1005
  %1007 = vrot.lane.b32.xlu0 %v777, 80
  %v1008 = vpop.permute.xlu0 %1007
  %1009 = vrot.lane.b32.xlu0 %v780, 80
  %v1010 = vpop.permute.xlu0 %1009
  %v1011 = vsel %vm159, %v1004, 0
  %v1013 = vsel %vm159, %v1006, 0
  %v1015 = vsel %vm159, %v1008, 0
  %v1017 = vsel %vm159, %v1010, 0
  %1019 = vmatpush.xpose.msra.mxu0 0.0
  %1020 = vmatpush.xpose.msra.mxu0 0.0
  %1021 = vmatpush.xpose.msra.mxu0 0.0
  %1022 = vmatpush.xpose.msra.mxu0 0.0
  %1023 = vmatpush.xpose.msra.mxu0 0.0
  %1024 = vmatpush.xpose.msra.mxu0 0.0
  %1025 = vmatpush.xpose.msra.mxu0 0.0
  %1026 = vmatpush.xpose.msra.mxu0 0.0
  %1027 = vmatpush.xpose.msra.mxu0 0.0
  %1028 = vmatpush.xpose.msra.mxu0 0.0
  %1029 = vmatpush.xpose.msra.mxu0 0.0
  %1030 = vmatpush.xpose.msra.mxu0 0.0
  %1031 = vmatpush.xpose.msra.mxu0 0.0
  %1032 = vmatpush.xpose.msra.mxu0 0.0
  %1033 = vmatpush.xpose.msra.mxu0 %v1017
  %1034 = vmatpush.xpose.msra.mxu0 %v1015
  %1035 = vmatmul.f32.gmra.mxu0 %v1011
  %v1036 = vpop.f32.mrf.mxu0
  %v1037 = vadd.f32 0.0, %v1036
  %1038 = vmatmul.f32.gmra.mxu0 %v1013
  %v1039 = vpop.f32.mrf.mxu0
  %v1040 = vadd.f32 0.0, %v1039
  %1041 = vdwg.mxu0
  %v1042 = vmul.f32 %v1037, 0.35355338
  %v1043 = vmul.f32 %v1040, 0.35355338
  %v1044 = vadd.f32 %v1042, %v21
  %v1045 = vadd.f32 %v1043, %v22
  %v1046 = vsel %vm195, %v1044, -inf
  %1047 = vmax.xlane.f32.xlu0 %v1046
  %v1048 = vpop.xlane.xlu0 %1047
  %v1049 = vsel %vm195, %v1045, -inf
  %1050 = vmax.xlane.f32.xlu0 %v1049
  %v1051 = vpop.xlane.xlu0 %1050
  %v1052 = vsub.f32 %v1044, %v1048
  %v1053 = vsub.f32 %v1045, %v1051
  %v1054 = vmul.f32 %v1052, 1.442695
  %v1055 = vpow.pop %v1054
  %v1056 = vmul.f32 %v1053, 1.442695
  %v1057 = vpow.pop %v1056
  %v1058 = vsel %vm195, %v1055, 0.0
  %1059 = vadd.xlane.f32.xlu0 %v1058
  %v1060 = vpop.xlane.xlu0 %1059
  %v1061 = vsel %vm195, %v1057, 0.0
  %1062 = vadd.xlane.f32.xlu0 %v1061
  %v1063 = vpop.xlane.xlu0 %1062
  %v1064 = vrcp.pop %v1060
  %v1065 = vrcp.pop %v1063
  %v1066 = vmul.f32 %v1055, %v1064
  %v1067 = vmul.f32 %v1057, %v1065
  %v1069 = vsel %vm195, %v1066, 0
  %v1072 = vsel %vm195, %v1067, 0
  %1074 = vmatpush.msra.mxu0 0.0
  %1075 = vmatpush.msra.mxu0 0.0
  %1076 = vmatpush.msra.mxu0 0.0
  %1077 = vmatpush.msra.mxu0 0.0
  %1078 = vmatpush.msra.mxu0 0.0
  %1079 = vmatpush.msra.mxu0 0.0
  %1080 = vmatpush.msra.mxu0 0.0
  %1081 = vmatpush.msra.mxu0 0.0
  %1082 = vmatpush.msra.mxu0 0.0
  %1083 = vmatpush.msra.mxu0 0.0
  %1084 = vmatpush.msra.mxu0 0.0
  %1085 = vmatpush.msra.mxu0 0.0
  %1086 = vmatpush.msra.mxu0 0.0
  %1087 = vmatpush.msra.mxu0 0.0
  %1088 = vmatpush.msra.mxu0 %v803
  %1089 = vmatpush.msra.mxu0 %v800
  %1090 = vmatmul.f32.gmra.mxu0 %v1069
  %v1091 = vpop.f32.mrf.mxu0
  %v1092 = vadd.f32 0.0, %v1091
  %1093 = vmatmul.f32.gmra.mxu0 %v1072
  %v1094 = vpop.f32.mrf.mxu0
  %v1095 = vadd.f32 0.0, %v1094
  %1096 = vdwg.mxu0
  %v1097 = vadd.f32 %v998, %v1092
  %v1098 = vadd.f32 %v1001, %v1095
  %1099 = vrot.lane.b32.xlu0 %v777, 104
  %v1100 = vpop.permute.xlu0 %1099
  %1101 = vrot.lane.b32.xlu0 %v780, 104
  %v1102 = vpop.permute.xlu0 %1101
  %1103 = vrot.lane.b32.xlu0 %v777, 72
  %v1104 = vpop.permute.xlu0 %1103
  %1105 = vrot.lane.b32.xlu0 %v780, 72
  %v1106 = vpop.permute.xlu0 %1105
  %v1107 = vsel %vm159, %v1100, 0
  %v1109 = vsel %vm159, %v1102, 0
  %v1111 = vsel %vm159, %v1104, 0
  %v1113 = vsel %vm159, %v1106, 0
  %1115 = vmatpush.xpose.msra.mxu0 0.0
  %1116 = vmatpush.xpose.msra.mxu0 0.0
  %1117 = vmatpush.xpose.msra.mxu0 0.0
  %1118 = vmatpush.xpose.msra.mxu0 0.0
  %1119 = vmatpush.xpose.msra.mxu0 0.0
  %1120 = vmatpush.xpose.msra.mxu0 0.0
  %1121 = vmatpush.xpose.msra.mxu0 0.0
  %1122 = vmatpush.xpose.msra.mxu0 0.0
  %1123 = vmatpush.xpose.msra.mxu0 0.0
  %1124 = vmatpush.xpose.msra.mxu0 0.0
  %1125 = vmatpush.xpose.msra.mxu0 0.0
  %1126 = vmatpush.xpose.msra.mxu0 0.0
  %1127 = vmatpush.xpose.msra.mxu0 0.0
  %1128 = vmatpush.xpose.msra.mxu0 0.0
  %1129 = vmatpush.xpose.msra.mxu0 %v1113
  %1130 = vmatpush.xpose.msra.mxu0 %v1111
  %1131 = vmatmul.f32.gmra.mxu0 %v1107
  %v1132 = vpop.f32.mrf.mxu0
  %v1133 = vadd.f32 0.0, %v1132
  %1134 = vmatmul.f32.gmra.mxu0 %v1109
  %v1135 = vpop.f32.mrf.mxu0
  %v1136 = vadd.f32 0.0, %v1135
  %1137 = vdwg.mxu0
  %v1138 = vmul.f32 %v1133, 0.35355338
  %v1139 = vmul.f32 %v1136, 0.35355338
  %v1140 = vadd.f32 %v1138, %v21
  %v1141 = vadd.f32 %v1139, %v22
  %v1142 = vsel %vm195, %v1140, -inf
  %1143 = vmax.xlane.f32.xlu0 %v1142
  %v1144 = vpop.xlane.xlu0 %1143
  %v1145 = vsel %vm195, %v1141, -inf
  %1146 = vmax.xlane.f32.xlu0 %v1145
  %v1147 = vpop.xlane.xlu0 %1146
  %v1148 = vsub.f32 %v1140, %v1144
  %v1149 = vsub.f32 %v1141, %v1147
  %v1150 = vmul.f32 %v1148, 1.442695
  %v1151 = vpow.pop %v1150
  %v1152 = vmul.f32 %v1149, 1.442695
  %v1153 = vpow.pop %v1152
  %v1154 = vsel %vm195, %v1151, 0.0
  %1155 = vadd.xlane.f32.xlu0 %v1154
  %v1156 = vpop.xlane.xlu0 %1155
  %v1157 = vsel %vm195, %v1153, 0.0
  %1158 = vadd.xlane.f32.xlu0 %v1157
  %v1159 = vpop.xlane.xlu0 %1158
  %v1160 = vrcp.pop %v1156
  %v1161 = vrcp.pop %v1159
  %v1162 = vmul.f32 %v1151, %v1160
  %v1163 = vmul.f32 %v1153, %v1161
  %1166 = vrot.lane.b32.xlu0 %v800, 96
  %v1167 = vpop.permute.xlu0 %1166
  %1168 = vrot.lane.b32.xlu0 %v803, 96
  %v1169 = vpop.permute.xlu0 %1168
  %v1173 = vsel %vm195, %v1162, 0
  %v1176 = vsel %vm195, %v1163, 0
  %1178 = vmatpush.msra.mxu0 0.0
  %1179 = vmatpush.msra.mxu0 0.0
  %1180 = vmatpush.msra.mxu0 0.0
  %1181 = vmatpush.msra.mxu0 0.0
  %1182 = vmatpush.msra.mxu0 0.0
  %1183 = vmatpush.msra.mxu0 0.0
  %1184 = vmatpush.msra.mxu0 0.0
  %1185 = vmatpush.msra.mxu0 0.0
  %1186 = vmatpush.msra.mxu0 0.0
  %1187 = vmatpush.msra.mxu0 0.0
  %1188 = vmatpush.msra.mxu0 0.0
  %1189 = vmatpush.msra.mxu0 0.0
  %1190 = vmatpush.msra.mxu0 0.0
  %1191 = vmatpush.msra.mxu0 0.0
  %1192 = vmatpush.msra.mxu0 %v1169
  %1193 = vmatpush.msra.mxu0 %v1167
  %1194 = vmatmul.f32.gmra.mxu0 %v1173
  %v1195 = vpop.f32.mrf.mxu0
  %v1196 = vadd.f32 0.0, %v1195
  %1197 = vmatmul.f32.gmra.mxu0 %v1176
  %v1198 = vpop.f32.mrf.mxu0
  %v1199 = vadd.f32 0.0, %v1198
  %1200 = vdwg.mxu0
  %v1201 = vadd.f32 %v1097, %v1196
  %v1202 = vadd.f32 %v1098, %v1199
  %v1203 = vperm.slane %v729, 1
  %v1204 = vadd.f32 %v1201, %v1203
  %v1205 = vadd.f32 %v1202, %v1203
  %v1206 = vadd.f32 %v727, %v1204
  %v1207 = vadd.f32 %v728, %v1205
  %v1208 = vsel %vm100, %v1206, 0.0
  %1209 = vadd.xlane.f32.xlu0 %v1208
  %v1210 = vpop.xlane.xlu0 %1209
  %v1211 = vsel %vm100, %v1207, 0.0
  %1212 = vadd.xlane.f32.xlu0 %v1211
  %v1213 = vpop.xlane.xlu0 %1212
  %v1214 = vmul.f32 %v1210, %v570
  %v1215 = vmul.f32 %v1213, %v570
  %v1216 = vsub.f32 %v1206, %v1214
  %v1217 = vsub.f32 %v1207, %v1215
  %v1218 = vmul.f32 %v1216, %v1216
  %v1219 = vmul.f32 %v1217, %v1217
  %v1220 = vsel %vm100, %v1218, 0.0
  %1221 = vadd.xlane.f32.xlu0 %v1220
  %v1222 = vpop.xlane.xlu0 %1221
  %v1223 = vsel %vm100, %v1219, 0.0
  %1224 = vadd.xlane.f32.xlu0 %v1223
  %v1225 = vpop.xlane.xlu0 %1224
  %v1226 = vmul.f32 %v1222, %v570
  %v1227 = vmul.f32 %v1225, %v570
  %v1228 = vadd.f32 %v1226, 1e-05
  %v1229 = vadd.f32 %v1227, 1e-05
  %v1230 = vrsqrt.pop %v1228
  %v1231 = vmul.f32 %v1230, %v1228
  %v1232 = vmul.f32 %v1231, %v1230
  %v1233 = vmul.f32 0.5, %v1232
  %v1234 = vsub.f32 1.5, %v1233
  %v1235 = vmul.f32 %v1230, %v1234
  %vm1236 = vweird.f32 %v1228
  %vm1237 = vweird.f32 %v1230
  %vm1238 = vmor %vm1236, %vm1237
  %v1239 = vsel %vm1238, %v1230, %v1235
  %v1240 = vrsqrt.pop %v1229
  %v1241 = vmul.f32 %v1240, %v1229
  %v1242 = vmul.f32 %v1241, %v1240
  %v1243 = vmul.f32 0.5, %v1242
  %v1244 = vsub.f32 1.5, %v1243
  %v1245 = vmul.f32 %v1240, %v1244
  %vm1246 = vweird.f32 %v1229
  %vm1247 = vweird.f32 %v1240
  %vm1248 = vmor %vm1246, %vm1247
  %v1249 = vsel %vm1248, %v1240, %v1245
  %v1250 = vmul.f32 %v1216, %v1239
  %v1251 = vmul.f32 %v1217, %v1249
  %v1252 = vperm.slane %v729, 2
  %v1253 = vmul.f32 %v1250, %v1252
  %v1254 = vmul.f32 %v1251, %v1252
  %v1255 = vperm.slane %v729, 3
  %v1256 = vadd.f32 %v1253, %v1255
  %v1257 = vadd.f32 %v1254, %v1255
  %v1258 = vperm.slane %v729, 4
  %v1260 = vsel %vm100, %v1256, 0
  %v1263 = vsel %vm100, %v1257, 0
  %1265 = vmatpush.msra.mxu0 0.0
  %1266 = vmatpush.msra.mxu0 0.0
  %1267 = vmatpush.msra.mxu0 0.0
  %1268 = vmatpush.msra.mxu0 0.0
  %1269 = vmatpush.msra.mxu0 0.0
  %1270 = vmatpush.msra.mxu0 0.0
  %1271 = vmatpush.msra.mxu0 0.0
  %1272 = vmatpush.msra.mxu0 0.0
  %1273 = vmatpush.msra.mxu0 0.0
  %1274 = vmatpush.msra.mxu0 0.0
  %1275 = vmatpush.msra.mxu0 0.0
  %1276 = vmatpush.msra.mxu0 0.0
  %1277 = vmatpush.msra.mxu0 %v742
  %1278 = vmatpush.msra.mxu0 %v741
  %1279 = vmatpush.msra.mxu0 %v740
  %1280 = vmatpush.msra.mxu0 %v739
  %1281 = vmatmul.f32.gmra.mxu0 %v1260
  %v1282 = vpop.f32.mrf.mxu0
  %v1283 = vadd.f32 %v1258, %v1282
  %1284 = vmatmul.f32.gmra.mxu0 %v1263
  %v1285 = vpop.f32.mrf.mxu0
  %v1286 = vadd.f32 %v1258, %v1285
  %1287 = vdwg.mxu0
  %v1288 = vmax.f32 %v1283, 0.0
  %v1289 = vmax.f32 %v1286, 0.0
  %v1290 = vperm.slane %v729, 5
  %v1292 = vsel %vm46, %v1288, 0
  %v1295 = vsel %vm46, %v1289, 0
  %1297 = vmatpush.msra.mxu0 0.0
  %1298 = vmatpush.msra.mxu0 0.0
  %1299 = vmatpush.msra.mxu0 0.0
  %1300 = vmatpush.msra.mxu0 0.0
  %1301 = vmatpush.msra.mxu0 0.0
  %1302 = vmatpush.msra.mxu0 0.0
  %1303 = vmatpush.msra.mxu0 0.0
  %1304 = vmatpush.msra.mxu0 0.0
  %1305 = vmatpush.msra.mxu0 %v750
  %1306 = vmatpush.msra.mxu0 %v749
  %1307 = vmatpush.msra.mxu0 %v748
  %1308 = vmatpush.msra.mxu0 %v747
  %1309 = vmatpush.msra.mxu0 %v746
  %1310 = vmatpush.msra.mxu0 %v745
  %1311 = vmatpush.msra.mxu0 %v744
  %1312 = vmatpush.msra.mxu0 %v743
  %1313 = vmatmul.f32.gmra.mxu0 %v1292
  %v1314 = vpop.f32.mrf.mxu0
  %v1315 = vadd.f32 %v1290, %v1314
  %1316 = vmatmul.f32.gmra.mxu0 %v1295
  %v1317 = vpop.f32.mrf.mxu0
  %v1318 = vadd.f32 %v1290, %v1317
  %1319 = vdwg.mxu0
  %v1320 = vadd.f32 %v1256, %v1315
  %v1321 = vadd.f32 %v1257, %v1318
  %v1322 = vsel %vm100, %v1320, 0.0
  %1323 = vadd.xlane.f32.xlu0 %v1322
  %v1324 = vpop.xlane.xlu0 %1323
  %v1325 = vsel %vm100, %v1321, 0.0
  %1326 = vadd.xlane.f32.xlu0 %v1325
  %v1327 = vpop.xlane.xlu0 %1326
  %v1328 = vmul.f32 %v1324, %v570
  %v1329 = vmul.f32 %v1327, %v570
  %v1330 = vsub.f32 %v1320, %v1328
  %v1331 = vsub.f32 %v1321, %v1329
  %v1332 = vmul.f32 %v1330, %v1330
  %v1333 = vmul.f32 %v1331, %v1331
  %v1334 = vsel %vm100, %v1332, 0.0
  %1335 = vadd.xlane.f32.xlu0 %v1334
  %v1336 = vpop.xlane.xlu0 %1335
  %v1337 = vsel %vm100, %v1333, 0.0
  %1338 = vadd.xlane.f32.xlu0 %v1337
  %v1339 = vpop.xlane.xlu0 %1338
  %v1340 = vmul.f32 %v1336, %v570
  %v1341 = vmul.f32 %v1339, %v570
  %v1342 = vadd.f32 %v1340, 1e-05
  %v1343 = vadd.f32 %v1341, 1e-05
  %v1344 = vrsqrt.pop %v1342
  %v1345 = vmul.f32 %v1344, %v1342
  %v1346 = vmul.f32 %v1345, %v1344
  %v1347 = vmul.f32 0.5, %v1346
  %v1348 = vsub.f32 1.5, %v1347
  %v1349 = vmul.f32 %v1344, %v1348
  %vm1350 = vweird.f32 %v1342
  %vm1351 = vweird.f32 %v1344
  %vm1352 = vmor %vm1350, %vm1351
  %v1353 = vsel %vm1352, %v1344, %v1349
  %v1354 = vrsqrt.pop %v1343
  %v1355 = vmul.f32 %v1354, %v1343
  %v1356 = vmul.f32 %v1355, %v1354
  %v1357 = vmul.f32 0.5, %v1356
  %v1358 = vsub.f32 1.5, %v1357
  %v1359 = vmul.f32 %v1354, %v1358
  %vm1360 = vweird.f32 %v1343
  %vm1361 = vweird.f32 %v1354
  %vm1362 = vmor %vm1360, %vm1361
  %v1363 = vsel %vm1362, %v1354, %v1359
  %v1364 = vmul.f32 %v1330, %v1353
  %v1365 = vmul.f32 %v1331, %v1363
  %v1366 = vperm.slane %v729, 6
  %v1367 = vmul.f32 %v1364, %v1366
  %v1368 = vmul.f32 %v1365, %v1366
  %v1369 = vperm.slane %v729, 7
  %v1370 = vadd.f32 %v1367, %v1369
  %v1371 = vadd.f32 %v1368, %v1369
  %v1372 = vld [vmem:[%s1 + $0x2c0] sm:$0xff]
  %v1373 = vld [vmem:[%s1 + $0x2d0] sm:$0xff]
  %v1374 = vld [vmem:[%s1 + $0x2e0] sm:$0xff]
  %v1375 = vld [vmem:[%s1 + $0x2f0] sm:$0xff]
  %v1376 = vld [vmem:[%s1 + $0x2b0] ss:$0 sm:$0xff]
  %v1378 = vsel %vm100, %v1370, 0
  %v1381 = vsel %vm100, %v1371, 0
  %1383 = vmatpush.msra.mxu0 0.0
  %1384 = vmatpush.msra.mxu0 0.0
  %1385 = vmatpush.msra.mxu0 0.0
  %1386 = vmatpush.msra.mxu0 0.0
  %1387 = vmatpush.msra.mxu0 0.0
  %1388 = vmatpush.msra.mxu0 0.0
  %1389 = vmatpush.msra.mxu0 0.0
  %1390 = vmatpush.msra.mxu0 0.0
  %1391 = vmatpush.msra.mxu0 0.0
  %1392 = vmatpush.msra.mxu0 0.0
  %1393 = vmatpush.msra.mxu0 0.0
  %1394 = vmatpush.msra.mxu0 0.0
  %1395 = vmatpush.msra.mxu0 %v1375
  %1396 = vmatpush.msra.mxu0 %v1374
  %1397 = vmatpush.msra.mxu0 %v1373
  %1398 = vmatpush.msra.mxu0 %v1372
  %1399 = vmatmul.f32.gmra.mxu0 %v1378
  %v1400 = vpop.f32.mrf.mxu0
  %v1401 = vadd.f32 %v1376, %v1400
  %1402 = vmatmul.f32.gmra.mxu0 %v1381
  %v1403 = vpop.f32.mrf.mxu0
  %v1404 = vadd.f32 %v1376, %v1403
  %1405 = vdwg.mxu0
  %1406 = vst [vmem:[%s2] sm:$0xff] %v1401
  %1407 = vst [vmem:[%s2 + $0x8] sm:$0xff] %v1404
  // Predicated region
  $region10: #{custom_transformer_forward.1} parent=0 // pred_check
    _
  $region11: #{custom_transformer_forward.1} parent=0 // pred_check_branch
    %1409 = sbr.rel (0) target = $region13
  $region12: #{custom_transformer_forward.1} parent=0 // pred_region
    _
  $region13: #{custom_transformer_forward.1} parent=0 // pred_fallthru
    _
  // Predicated region
  $region14: #{custom_transformer_forward.1} parent=0 // pred_check
    _
  $region15: #{custom_transformer_forward.1} parent=0 // pred_check_branch
    %1411 = sbr.rel (0) target = $region17
  $region16: #{custom_transformer_forward.1} parent=0 // pred_region
    _
  $region17: #{custom_transformer_forward.1} parent=0 // pred_fallthru
    _

</llo_original>
